<compile_context>
chip_gen: v7x
topology: tpu7x:2x2x1
jax: 0.10.0
libtpu: 0.0.40
codegen_flags: <defaults>
</compile_context>

<pallas_src>
import functools

import jax
import jax.numpy as jnp
from jax import lax
from jax.experimental import pallas as pl
from jax.experimental.pallas import tpu as pltpu


# -----------------------------------------------------------------------------
# Small helpers.
# -----------------------------------------------------------------------------
def _imod(x, n):
    if n & (n - 1) == 0:
        return jnp.bitwise_and(x, n - 1)
    return x % n


def _w_dtype(cin):
    # bf16 weights whenever the per-tap row slabs stay 16-sublane aligned (or
    # the lane-concat path is used); otherwise keep f32 and cast in-kernel.
    return jnp.bfloat16 if cin % 16 == 0 else jnp.float32


def _pick_batch_tile(B, T, T_final):
    """Smallest batch tile (whole samples) that keeps row counts 8-aligned and
    gives a reasonably large matmul M; falls back to the full batch."""
    for bt in range(1, B):
        if B % bt:
            continue
        if (bt * T) % 8 == 0 and (bt * T_final) % 8 == 0 and bt * T_final >= 128:
            return bt
    return B


# -----------------------------------------------------------------------------
# The fused kernel: all three ResBlocks for one batch tile.
# -----------------------------------------------------------------------------
def _baseline_kernel(*refs, Bt, T0, block_cfg):
    # refs = (x, w1/w2[/wr] per block..., packed_shifts, out, tap_scratch)
    x_ref = refs[0]
    shifts_ref = refs[-3]
    out_ref = refs[-2]
    tap_scratch = refs[-1]
    w_refs = refs[1:-3]

    mask_cache = {}

    def masks_for(M, T):
        key = (M, T)
        if key not in mask_cache:
            # (M, 1) column mask (hoisted, broadcast in the where) instead of a
            # fresh (M, C) iota per conv.
            t = _imod(lax.broadcasted_iota(jnp.int32, (M, 1), 0), T)
            mask_cache[key] = (t == 0, t == (T - 1))
        return mask_cache[key]

    def taps_of(h, T):
        """k=3 / padding=1 taps: up[m]=h[m-1], dn[m]=h[m+1], zero at the
        per-sample boundaries (the roll wraparound rows are always masked)."""
        M = h.shape[0]
        first, last = masks_for(M, T)
        up = jnp.where(first, 0.0, pltpu.roll(h, 1, axis=0))
        dn = jnp.where(last, 0.0, pltpu.roll(h, M - 1, axis=0))
        return up, h, dn

    def strided_rows(v, T, T_out, stride):
        """Per-sample rows 0, s, 2s, ... of v (rows = Bt*T): store to scratch,
        read back with a strided ref slice (no selection matmul)."""
        M, C = v.shape
        tap_scratch[0:M, 0:C] = v
        M_out = Bt * T_out
        if T % stride == 0:
            # per-sample strided rows tile into one global stride-s pattern
            return tap_scratch[pl.ds(0, M_out, stride=stride), 0:C]
        pieces = [tap_scratch[pl.ds(b * T, T_out, stride=stride), 0:C]
                  for b in range(Bt)]
        return jnp.concatenate(pieces, axis=0)

    def conv3(taps, w_ref):
        """Conv1d(k=3) as bf16 MXU matmul(s) against the stacked (3*Cin, Cout)
        weight (BN scale already folded in on the host)."""
        C = taps[0].shape[1]
        if C == 128:
            # lane-tile exact: one K=3*Cin matmul (2 MXU K-passes on v6e/v7x).
            lhs = jnp.concatenate([t.astype(jnp.bfloat16) for t in taps],
                                  axis=-1)
            return jnp.dot(lhs, w_ref[...], preferred_element_type=jnp.float32)
        # per-tap matmuls (first block Cin=8; also the right choice for
        # Cin % 256 == 0, e.g. 768, and on v5e in general).
        w = w_ref[...]
        out = None
        for i, t in enumerate(taps):
            p = jnp.dot(t.astype(jnp.bfloat16),
                        w[i * C:(i + 1) * C, :].astype(jnp.bfloat16),
                        preferred_element_type=jnp.float32)
            out = p if out is None else out + p
        return out

    def shift_row(i):
        return shifts_ref[i:i + 1, :]            # (1, Cout) f32

    h = x_ref[...].astype(jnp.float32)           # activations stay f32 in VMEM
    T = T0
    widx = 0
    sidx = 0
    for stride, has_res in block_cfg:
        T_out = (T - 1) // stride + 1
        w1_ref, w2_ref = w_refs[widx], w_refs[widx + 1]
        wr_ref = w_refs[widx + 2] if has_res else None
        widx += 3 if has_res else 2

        up, cc, dn = taps_of(h, T)
        if stride != 1:
            up = strided_rows(up, T, T_out, stride)
            cc = strided_rows(cc, T, T_out, stride)
            dn = strided_rows(dn, T, T_out, stride)
            h_res = cc                            # residual input, already strided
        else:
            h_res = h

        # conv1 (+ folded bn1 shift) + relu
        y = jnp.maximum(conv3((up, cc, dn), w1_ref) + shift_row(sidx), 0.0)
        # conv2 (+ folded bn2 shift)
        y2 = conv3(taps_of(y, T_out), w2_ref) + shift_row(sidx + 1)
        # residual path: folded 1x1 conv + bn, or identity
        if has_res:
            res = (jnp.dot(h_res.astype(jnp.bfloat16), wr_ref[...],
                           preferred_element_type=jnp.float32)
                   + shift_row(sidx + 2))
            sidx += 3
        else:
            res = h_res
            sidx += 2

        h = jnp.maximum(y2 + res, 0.0)
        T = T_out

    out_ref[...] = h                              # lane-dense (Bt*T_out, H) store


# -----------------------------------------------------------------------------
# Wrapper: layout plumbing, batch-tiled grid, specs, cost estimate.
# -----------------------------------------------------------------------------
def pallas_forward(x, params):
    """x: (B, C, T) channels-first (PyTorch layout). Returns (B, H, T_out)."""
    B, C, T = x.shape
    # channels-last with batch folded into matmul rows
    x2d = jnp.transpose(x, (0, 2, 1)).reshape(B * T, C)

    blocks = params["blocks"]
    strides = [blk["stride"] for blk in blocks]
    T_seq = [T]
    for s in strides:
        T_seq.append((T_seq[-1] - 1) // s + 1)
    T_final = T_seq[-1]
    H = blocks[-1]["kernel"]["w2"].shape[-1]
    cins = [blk["kernel"]["w1"].shape[0] // 3 for blk in blocks]

    Bt = _pick_batch_tile(B, T, T_final)
    grid = (B // Bt,)

    args = [x2d]
    in_specs = [pl.BlockSpec((Bt * T, C), lambda i: (i, 0))]
    shifts = []
    block_cfg = []
    for blk in blocks:
        k = blk["kernel"]
        names = ["w1", "w2", "wr"] if blk["has_res"] else ["w1", "w2"]
        for nm in names:
            args.append(k[nm])
            # NOTE: at H=768, pipeline_mode=pl.Buffered(1) here would drop the
            # pointless double-buffering of these constant-index weight blocks.
            in_specs.append(pl.BlockSpec(k[nm].shape, lambda i: (0, 0)))
        shifts += [k["c1"], k["c2"]] + ([k["cr"]] if blk["has_res"] else [])
        block_cfg.append((blk["stride"], blk["has_res"]))
    shifts_arr = jnp.concatenate(shifts, axis=0)          # (num_shifts, H) f32
    args.append(shifts_arr)
    in_specs.append(pl.BlockSpec(shifts_arr.shape, lambda i: (0, 0)))

    # scratch for the strided tap reads (max over strided blocks, per tile)
    sc_rows, sc_cols = 8, 128
    for (s, _), cin, T_in in zip(block_cfg, cins, T_seq[:-1]):
        if s != 1:
            sc_rows = max(sc_rows, Bt * T_in)
            sc_cols = max(sc_cols, cin)

    # advisory cost estimate (full call, all tiles)
    flops = 0
    for (s, has_res), cin, T_out in zip(block_cfg, cins, T_seq[1:]):
        M_out = B * T_out
        flops += 2 * M_out * 3 * cin * H          # conv1
        flops += 2 * M_out * 3 * H * H            # conv2
        if has_res:
            flops += 2 * M_out * cin * H          # 1x1 residual conv
    bytes_accessed = (sum(int(a.size) * a.dtype.itemsize for a in args)
                      + B * T_final * H * 4)
    cost = pl.CostEstimate(flops=int(flops), transcendentals=0,
                           bytes_accessed=int(bytes_accessed))

    kernel = functools.partial(_baseline_kernel, Bt=Bt, T0=T,
                               block_cfg=tuple(block_cfg))
    out2d = pl.pallas_call(
        kernel,
        out_shape=jax.ShapeDtypeStruct((B * T_final, H), jnp.float32),
        grid=grid,
        in_specs=in_specs,
        out_specs=pl.BlockSpec((Bt * T_final, H), lambda i: (i, 0)),
        scratch_shapes=[pltpu.VMEM((sc_rows, sc_cols), jnp.float32)],
        compiler_params=pltpu.CompilerParams(
            dimension_semantics=("parallel",),
            vmem_limit_bytes=64 * 1024 * 1024),
        cost_estimate=cost,
    )(*args)
    # (B*T_out, H) lane-dense kernel output -> PyTorch (B, H, T_out)
    return jnp.transpose(out2d.reshape(B, T_final, H), (0, 2, 1))


# -----------------------------------------------------------------------------
# Parameter construction (deterministic) + BN folding (eval mode).
# -----------------------------------------------------------------------------
def _bn_params(cout):
    # PyTorch BatchNorm1d defaults: gamma=1, beta=0, running_mean=0, running_var=1.
    # TODO(synk): BatchNorm is folded in eval mode (running stats); train-mode
    # batch statistics are not modeled.
    return (jnp.ones((cout,), jnp.float32), jnp.zeros((cout,), jnp.float32),
            jnp.zeros((cout,), jnp.float32), jnp.ones((cout,), jnp.float32))


def _bn_scale_shift(bn, conv_bias, eps=1e-5):
    gamma, beta, mean, var = bn
    scale = gamma / jnp.sqrt(var + eps)
    shift = (conv_bias - mean) * scale + beta
    return scale.astype(jnp.float32), shift[None, :].astype(jnp.float32)


def fold_block(raw, has_res):
    """Fold conv bias + eval-mode BN into per-channel shift, fold the BN scale
    directly into the (3*Cin, Cout) stacked im2col weights, cast to bf16."""
    w1, w2 = raw["conv1_w"], raw["conv2_w"]       # (Cout, Cin, 3) PyTorch layout
    cin1, cin2 = w1.shape[1], w2.shape[1]
    s1, c1 = _bn_scale_shift(raw["bn1"], raw["conv1_b"])
    s2, c2 = _bn_scale_shift(raw["bn2"], raw["conv2_b"])
    w1s = jnp.concatenate([w1[:, :, t].T for t in range(3)], axis=0) * s1[None, :]
    w2s = jnp.concatenate([w2[:, :, t].T for t in range(3)], axis=0) * s2[None, :]
    k = {"w1": w1s.astype(_w_dtype(cin1)), "w2": w2s.astype(_w_dtype(cin2)),
         "c1": c1, "c2": c2}
    if has_res:
        sr, cr = _bn_scale_shift(raw["bnr"], raw["convr_b"])
        k["wr"] = (raw["convr_w"][:, :, 0].T * sr[None, :]).astype(jnp.bfloat16)
        k["cr"] = cr
    return k


def init_params(key, in_channels, hidden_dim):
    # Baseline: ResBlock(C, H, stride=1), ResBlock(H, H, 2), ResBlock(H, H, 2)
    specs = [(in_channels, hidden_dim, 1),
             (hidden_dim, hidden_dim, 2),
             (hidden_dim, hidden_dim, 2)]
    keys = iter(jax.random.split(key, 8 * len(specs)))

    def uni(shape, fan_in):
        bound = 1.0 / (fan_in ** 0.5)             # PyTorch Conv1d default init
        return jax.random.uniform(next(keys), shape, jnp.float32, -bound, bound)

    blocks = []
    for cin, cout, stride in specs:
        has_res = (stride != 1) or (cin != cout)
        raw = {
            "conv1_w": uni((cout, cin, 3), cin * 3),
            "conv1_b": uni((cout,), cin * 3),
            "bn1": _bn_params(cout),
            "conv2_w": uni((cout, cout, 3), cout * 3),
            "conv2_b": uni((cout,), cout * 3),
            "bn2": _bn_params(cout),
        }
        if has_res:
            raw["convr_w"] = uni((cout, cin, 1), cin)
            raw["convr_b"] = uni((cout,), cin)
            raw["bnr"] = _bn_params(cout)
        blocks.append({"raw": raw, "stride": stride, "has_res": has_res,
                       "kernel": fold_block(raw, has_res)})
    return {"blocks": blocks}


# -----------------------------------------------------------------------------
# Pure-JAX reference (lax.conv) for validation.  op_dtype=bfloat16 mirrors the
# kernel's bf16-operand / f32-accumulate matmul numerics.
# -----------------------------------------------------------------------------
def _ref_conv1d(x_nct, w, b, pad, stride, op_dtype):
    y = lax.conv_general_dilated(
        x_nct.astype(op_dtype), w.astype(op_dtype),
        window_strides=(stride,), padding=[(pad, pad)],
        dimension_numbers=("NCH", "OIH", "NCH"),
        preferred_element_type=jnp.float32)
    return y + b[None, :, None]


def _ref_bn(y, bn, eps=1e-5):
    gamma, beta, mean, var = bn
    return ((y - mean[None, :, None]) / jnp.sqrt(var[None, :, None] + eps)
            * gamma[None, :, None] + beta[None, :, None])


def reference_forward(x, params, op_dtype=jnp.float32):
    h = x
    for blk in params["blocks"]:
        raw, s = blk["raw"], blk["stride"]
        y = jnp.maximum(
            _ref_bn(_ref_conv1d(h, raw["conv1_w"], raw["conv1_b"], 1, s,
                                op_dtype), raw["bn1"]), 0.0)
        y = _ref_bn(_ref_conv1d(y, raw["conv2_w"], raw["conv2_b"], 1, 1,
                                op_dtype), raw["bn2"])
        if blk["has_res"]:
            r = _ref_bn(_ref_conv1d(h, raw["convr_w"], raw["convr_b"], 0, s,
                                    op_dtype), raw["bnr"])
        else:
            r = h
        h = jnp.maximum(y + r, 0.0)
    return h


if __name__ == "__main__":
    B, C, T = 2, 8, 16            # x: (batchsize, num_in_feats, seq_len)
    HIDDEN = 128                  # small lane-dense stand-in for the 768 default

    key = jax.random.PRNGKey(0)
    kx, kp = jax.random.split(key)
    x = jax.random.normal(kx, (B, C, T), dtype=jnp.float32)
    params = init_params(kp, C, HIDDEN)

    out = jax.block_until_ready(pallas_forward(x, params))

    T_out = T
    for blk in params["blocks"]:
        T_out = (T_out - 1) // blk["stride"] + 1
    assert out.shape == (B, HIDDEN, T_out), out.shape

    # Tight check vs a reference with the same bf16-operand matmul numerics
    # (structural correctness), plus a looser check vs the pure-f32 reference
    # (bounds the bf16 quantization noise).
    ref_bf = reference_forward(x, params, op_dtype=jnp.bfloat16)
    ref_f32 = reference_forward(x, params, op_dtype=jnp.float32)
    assert ref_f32.shape == out.shape, (ref_f32.shape, out.shape)

    if not jnp.allclose(out, ref_bf, atol=5e-3, rtol=5e-3):
        raise AssertionError(
            f"mismatch vs bf16-operand reference, max abs err = "
            f"{float(jnp.max(jnp.abs(out - ref_bf)))}")
    if not jnp.allclose(out, ref_f32, atol=5e-2, rtol=5e-2):
        raise AssertionError(
            f"mismatch vs f32 reference, max abs err = "
            f"{float(jnp.max(jnp.abs(out - ref_f32)))}")
    print("KERNEL_OK")
</pallas_src>

<mosaic_0001>
module attributes {stable_mosaic.version = 11 : i64} {
  func.func @_baseline_kernel(%arg0: i32, %arg1: memref<32x8xf32, #tpu.memory_space<vmem>>, %arg2: memref<24x128xf32, #tpu.memory_space<vmem>>, %arg3: memref<384x128xbf16, #tpu.memory_space<vmem>>, %arg4: memref<8x128xbf16, #tpu.memory_space<vmem>>, %arg5: memref<384x128xbf16, #tpu.memory_space<vmem>>, %arg6: memref<384x128xbf16, #tpu.memory_space<vmem>>, %arg7: memref<128x128xbf16, #tpu.memory_space<vmem>>, %arg8: memref<384x128xbf16, #tpu.memory_space<vmem>>, %arg9: memref<384x128xbf16, #tpu.memory_space<vmem>>, %arg10: memref<128x128xbf16, #tpu.memory_space<vmem>>, %arg11: memref<9x128xf32, #tpu.memory_space<vmem>>, %arg12: memref<8x128xf32, #tpu.memory_space<vmem>>, %arg13: memref<32x128xf32, #tpu.memory_space<vmem>>) attributes {dimension_semantics = [#tpu.dimension_semantics<parallel>], iteration_bounds = array<i64: 1>, scalar_prefetch = 0 : i64, scratch_operands = 1 : i64, tpu.core_type = #tpu.core_type<tc>, window_params = [{transform_indices = @transform_0, window_bounds = array<i64: 32, 8>}, {pipeline_mode = #tpu.pipeline_mode<synchronous>, transform_indices = @transform_1, window_bounds = array<i64: 24, 128>}, {pipeline_mode = #tpu.pipeline_mode<synchronous>, transform_indices = @transform_2, window_bounds = array<i64: 384, 128>}, {pipeline_mode = #tpu.pipeline_mode<synchronous>, transform_indices = @transform_3, window_bounds = array<i64: 8, 128>}, {pipeline_mode = #tpu.pipeline_mode<synchronous>, transform_indices = @transform_4, window_bounds = array<i64: 384, 128>}, {pipeline_mode = #tpu.pipeline_mode<synchronous>, transform_indices = @transform_5, window_bounds = array<i64: 384, 128>}, {pipeline_mode = #tpu.pipeline_mode<synchronous>, transform_indices = @transform_6, window_bounds = array<i64: 128, 128>}, {pipeline_mode = #tpu.pipeline_mode<synchronous>, transform_indices = @transform_7, window_bounds = array<i64: 384, 128>}, {pipeline_mode = #tpu.pipeline_mode<synchronous>, transform_indices = @transform_8, window_bounds = array<i64: 384, 128>}, {pipeline_mode = #tpu.pipeline_mode<synchronous>, transform_indices = @transform_9, window_bounds = array<i64: 128, 128>}, {pipeline_mode = #tpu.pipeline_mode<synchronous>, transform_indices = @transform_10, window_bounds = array<i64: 9, 128>}, {transform_indices = @transform_11, window_bounds = array<i64: 8, 128>}]} {
    %c0 = arith.constant 0 : index
    %c0_0 = arith.constant 0 : index
    %0 = vector.load %arg1[%c0, %c0_0] : memref<32x8xf32, #tpu.memory_space<vmem>>, vector<32x8xf32>
    %1 = tpu.iota {dimensions = array<i32: 0>} : vector<32x1xi32>
    %c15_i32 = arith.constant 15 : i32
    %2 = vector.broadcast %c15_i32 : i32 to vector<32x1xi32>
    %3 = arith.andi %1, %2 : vector<32x1xi32>
    %c0_i32 = arith.constant 0 : i32
    %4 = vector.broadcast %c0_i32 : i32 to vector<32x1xi32>
    %5 = arith.cmpi eq, %3, %4 : vector<32x1xi32>
    %c15_i32_1 = arith.constant 15 : i32
    %6 = vector.broadcast %c15_i32_1 : i32 to vector<32x1xi32>
    %7 = arith.cmpi eq, %3, %6 : vector<32x1xi32>
    %c1_i32 = arith.constant 1 : i32
    %8 = tpu.dynamic_rotate %0 by %c1_i32 dim 0 : vector<32x8xf32>, i32 -> vector<32x8xf32>
    %cst = arith.constant 0.000000e+00 : f32
    %9 = vector.shape_cast %5 : vector<32x1xi1> to vector<32x1xi1>
    %10 = vector.broadcast %9 : vector<32x1xi1> to vector<32x8xi1>
    %11 = vector.broadcast %cst : f32 to vector<32x8xf32>
    %12 = arith.select %10, %11, %8 : vector<32x8xi1>, vector<32x8xf32>
    %c31_i32 = arith.constant 31 : i32
    %13 = tpu.dynamic_rotate %0 by %c31_i32 dim 0 : vector<32x8xf32>, i32 -> vector<32x8xf32>
    %cst_2 = arith.constant 0.000000e+00 : f32
    %14 = vector.shape_cast %7 : vector<32x1xi1> to vector<32x1xi1>
    %15 = vector.broadcast %14 : vector<32x1xi1> to vector<32x8xi1>
    %16 = vector.broadcast %cst_2 : f32 to vector<32x8xf32>
    %17 = arith.select %15, %16, %13 : vector<32x8xi1>, vector<32x8xf32>
    %c0_3 = arith.constant 0 : index
    %c0_4 = arith.constant 0 : index
    %18 = vector.load %arg2[%c0_3, %c0_4] : memref<24x128xf32, #tpu.memory_space<vmem>>, vector<24x128xf32>
    %19 = arith.truncf %12 : vector<32x8xf32> to vector<32x8xbf16>
    %20 = vector.extract_strided_slice %18 {offsets = [0, 0], sizes = [8, 128], strides = [1, 1]} : vector<24x128xf32> to vector<8x128xf32>
    %21 = arith.truncf %20 : vector<8x128xf32> to vector<8x128xbf16>
    %cst_5 = arith.constant dense<0.000000e+00> : vector<32x128xf32>
    %22 = tpu.matmul %19, %21, %cst_5 {dimension_numbers = #tpu.dot_dimension_numbers<[1], [0], [0], [1], [0, 0, 1, 1], [], []>} : vector<32x8xbf16>, vector<8x128xbf16>, vector<32x128xf32> -> vector<32x128xf32>
    %23 = arith.truncf %0 : vector<32x8xf32> to vector<32x8xbf16>
    %24 = vector.extract_strided_slice %18 {offsets = [8, 0], sizes = [8, 128], strides = [1, 1]} : vector<24x128xf32> to vector<8x128xf32>
    %25 = arith.truncf %24 : vector<8x128xf32> to vector<8x128xbf16>
    %cst_6 = arith.constant dense<0.000000e+00> : vector<32x128xf32>
    %26 = tpu.matmul %23, %25, %cst_6 {dimension_numbers = #tpu.dot_dimension_numbers<[1], [0], [0], [1], [0, 0, 1, 1], [], []>} : vector<32x8xbf16>, vector<8x128xbf16>, vector<32x128xf32> -> vector<32x128xf32>
    %27 = arith.addf %22, %26 : vector<32x128xf32>
    %28 = arith.truncf %17 : vector<32x8xf32> to vector<32x8xbf16>
    %29 = vector.extract_strided_slice %18 {offsets = [16, 0], sizes = [8, 128], strides = [1, 1]} : vector<24x128xf32> to vector<8x128xf32>
    %30 = arith.truncf %29 : vector<8x128xf32> to vector<8x128xbf16>
    %cst_7 = arith.constant dense<0.000000e+00> : vector<32x128xf32>
    %31 = tpu.matmul %28, %30, %cst_7 {dimension_numbers = #tpu.dot_dimension_numbers<[1], [0], [0], [1], [0, 0, 1, 1], [], []>} : vector<32x8xbf16>, vector<8x128xbf16>, vector<32x128xf32> -> vector<32x128xf32>
    %32 = arith.addf %27, %31 : vector<32x128xf32>
    %c0_8 = arith.constant 0 : index
    %c0_9 = arith.constant 0 : index
    %33 = vector.load %arg11[%c0_8, %c0_9] : memref<9x128xf32, #tpu.memory_space<vmem>>, vector<1x128xf32>
    %34 = vector.broadcast %33 : vector<1x128xf32> to vector<32x128xf32>
    %35 = arith.addf %32, %34 : vector<32x128xf32>
    %cst_10 = arith.constant 0.000000e+00 : f32
    %36 = vector.broadcast %cst_10 : f32 to vector<32x128xf32>
    %37 = arith.maximumf %35, %36 : vector<32x128xf32>
    %c1_i32_11 = arith.constant 1 : i32
    %38 = tpu.dynamic_rotate %37 by %c1_i32_11 dim 0 : vector<32x128xf32>, i32 -> vector<32x128xf32>
    %cst_12 = arith.constant 0.000000e+00 : f32
    %39 = vector.shape_cast %5 : vector<32x1xi1> to vector<32x1xi1>
    %40 = vector.broadcast %39 : vector<32x1xi1> to vector<32x128xi1>
    %41 = vector.broadcast %cst_12 : f32 to vector<32x128xf32>
    %42 = arith.select %40, %41, %38 : vector<32x128xi1>, vector<32x128xf32>
    %c31_i32_13 = arith.constant 31 : i32
    %43 = tpu.dynamic_rotate %37 by %c31_i32_13 dim 0 : vector<32x128xf32>, i32 -> vector<32x128xf32>
    %cst_14 = arith.constant 0.000000e+00 : f32
    %44 = vector.shape_cast %7 : vector<32x1xi1> to vector<32x1xi1>
    %45 = vector.broadcast %44 : vector<32x1xi1> to vector<32x128xi1>
    %46 = vector.broadcast %cst_14 : f32 to vector<32x128xf32>
    %47 = arith.select %45, %46, %43 : vector<32x128xi1>, vector<32x128xf32>
    %48 = arith.truncf %42 : vector<32x128xf32> to vector<32x128xbf16>
    %49 = arith.truncf %37 : vector<32x128xf32> to vector<32x128xbf16>
    %50 = arith.truncf %47 : vector<32x128xf32> to vector<32x128xbf16>
    %51 = tpu.concatenate %48, %49, %50 in 1 : vector<32x128xbf16>, vector<32x128xbf16>, vector<32x128xbf16> -> vector<32x384xbf16>
    %c0_15 = arith.constant 0 : index
    %c0_16 = arith.constant 0 : index
    %52 = vector.load %arg3[%c0_15, %c0_16] : memref<384x128xbf16, #tpu.memory_space<vmem>>, vector<384x128xbf16>
    %cst_17 = arith.constant dense<0.000000e+00> : vector<32x128xf32>
    %53 = tpu.matmul %51, %52, %cst_17 {dimension_numbers = #tpu.dot_dimension_numbers<[1], [0], [0], [1], [0, 0, 1, 1], [], []>} : vector<32x384xbf16>, vector<384x128xbf16>, vector<32x128xf32> -> vector<32x128xf32>
    %c1 = arith.constant 1 : index
    %c0_18 = arith.constant 0 : index
    %54 = vector.load %arg11[%c1, %c0_18] : memref<9x128xf32, #tpu.memory_space<vmem>>, vector<1x128xf32>
    %55 = vector.broadcast %54 : vector<1x128xf32> to vector<32x128xf32>
    %56 = arith.addf %53, %55 : vector<32x128xf32>
    %57 = arith.truncf %0 : vector<32x8xf32> to vector<32x8xbf16>
    %c0_19 = arith.constant 0 : index
    %c0_20 = arith.constant 0 : index
    %58 = vector.load %arg4[%c0_19, %c0_20] : memref<8x128xbf16, #tpu.memory_space<vmem>>, vector<8x128xbf16>
    %cst_21 = arith.constant dense<0.000000e+00> : vector<32x128xf32>
    %59 = tpu.matmul %57, %58, %cst_21 {dimension_numbers = #tpu.dot_dimension_numbers<[1], [0], [0], [1], [0, 0, 1, 1], [], []>} : vector<32x8xbf16>, vector<8x128xbf16>, vector<32x128xf32> -> vector<32x128xf32>
    %c2 = arith.constant 2 : index
    %c0_22 = arith.constant 0 : index
    %60 = vector.load %arg11[%c2, %c0_22] : memref<9x128xf32, #tpu.memory_space<vmem>>, vector<1x128xf32>
    %61 = vector.broadcast %60 : vector<1x128xf32> to vector<32x128xf32>
    %62 = arith.addf %59, %61 : vector<32x128xf32>
    %63 = arith.addf %56, %62 : vector<32x128xf32>
    %cst_23 = arith.constant 0.000000e+00 : f32
    %64 = vector.broadcast %cst_23 : f32 to vector<32x128xf32>
    %65 = arith.maximumf %63, %64 : vector<32x128xf32>
    %c1_i32_24 = arith.constant 1 : i32
    %66 = tpu.dynamic_rotate %65 by %c1_i32_24 dim 0 : vector<32x128xf32>, i32 -> vector<32x128xf32>
    %cst_25 = arith.constant 0.000000e+00 : f32
    %67 = vector.shape_cast %5 : vector<32x1xi1> to vector<32x1xi1>
    %68 = vector.broadcast %67 : vector<32x1xi1> to vector<32x128xi1>
    %69 = vector.broadcast %cst_25 : f32 to vector<32x128xf32>
    %70 = arith.select %68, %69, %66 : vector<32x128xi1>, vector<32x128xf32>
    %c31_i32_26 = arith.constant 31 : i32
    %71 = tpu.dynamic_rotate %65 by %c31_i32_26 dim 0 : vector<32x128xf32>, i32 -> vector<32x128xf32>
    %cst_27 = arith.constant 0.000000e+00 : f32
    %72 = vector.shape_cast %7 : vector<32x1xi1> to vector<32x1xi1>
    %73 = vector.broadcast %72 : vector<32x1xi1> to vector<32x128xi1>
    %74 = vector.broadcast %cst_27 : f32 to vector<32x128xf32>
    %75 = arith.select %73, %74, %71 : vector<32x128xi1>, vector<32x128xf32>
    %c0_28 = arith.constant 0 : index
    %c0_29 = arith.constant 0 : index
    %76 = vector.load %arg13[%c0_28, %c0_29] : memref<32x128xf32, #tpu.memory_space<vmem>>, vector<32x128xf32>
    tpu.vector_store %arg13[%c0_28, %c0_29], %70 {strides = array<i32>} : memref<32x128xf32, #tpu.memory_space<vmem>>, vector<32x128xf32>,
    %c0_30 = arith.constant 0 : index
    %c0_31 = arith.constant 0 : index
    %77 = tpu.strided_load %arg13[%c0_30, %c0_31] {strides = array<i32: 2, 1>} : memref<32x128xf32, #tpu.memory_space<vmem>>, vector<16x128xf32>
    %c0_32 = arith.constant 0 : index
    %c0_33 = arith.constant 0 : index
    %78 = vector.load %arg13[%c0_32, %c0_33] : memref<32x128xf32, #tpu.memory_space<vmem>>, vector<32x128xf32>
    tpu.vector_store %arg13[%c0_32, %c0_33], %65 {strides = array<i32>} : memref<32x128xf32, #tpu.memory_space<vmem>>, vector<32x128xf32>,
    %c0_34 = arith.constant 0 : index
    %c0_35 = arith.constant 0 : index
    %79 = tpu.strided_load %arg13[%c0_34, %c0_35] {strides = array<i32: 2, 1>} : memref<32x128xf32, #tpu.memory_space<vmem>>, vector<16x128xf32>
    %c0_36 = arith.constant 0 : index
    %c0_37 = arith.constant 0 : index
    %80 = vector.load %arg13[%c0_36, %c0_37] : memref<32x128xf32, #tpu.memory_space<vmem>>, vector<32x128xf32>
    tpu.vector_store %arg13[%c0_36, %c0_37], %75 {strides = array<i32>} : memref<32x128xf32, #tpu.memory_space<vmem>>, vector<32x128xf32>,
    %c0_38 = arith.constant 0 : index
    %c0_39 = arith.constant 0 : index
    %81 = tpu.strided_load %arg13[%c0_38, %c0_39] {strides = array<i32: 2, 1>} : memref<32x128xf32, #tpu.memory_space<vmem>>, vector<16x128xf32>
    %82 = arith.truncf %77 : vector<16x128xf32> to vector<16x128xbf16>
    %83 = arith.truncf %79 : vector<16x128xf32> to vector<16x128xbf16>
    %84 = arith.truncf %81 : vector<16x128xf32> to vector<16x128xbf16>
    %85 = tpu.concatenate %82, %83, %84 in 1 : vector<16x128xbf16>, vector<16x128xbf16>, vector<16x128xbf16> -> vector<16x384xbf16>
    %c0_40 = arith.constant 0 : index
    %c0_41 = arith.constant 0 : index
    %86 = vector.load %arg5[%c0_40, %c0_41] : memref<384x128xbf16, #tpu.memory_space<vmem>>, vector<384x128xbf16>
    %cst_42 = arith.constant dense<0.000000e+00> : vector<16x128xf32>
    %87 = tpu.matmul %85, %86, %cst_42 {dimension_numbers = #tpu.dot_dimension_numbers<[1], [0], [0], [1], [0, 0, 1, 1], [], []>} : vector<16x384xbf16>, vector<384x128xbf16>, vector<16x128xf32> -> vector<16x128xf32>
    %c3 = arith.constant 3 : index
    %c0_43 = arith.constant 0 : index
    %88 = vector.load %arg11[%c3, %c0_43] : memref<9x128xf32, #tpu.memory_space<vmem>>, vector<1x128xf32>
    %89 = vector.broadcast %88 : vector<1x128xf32> to vector<16x128xf32>
    %90 = arith.addf %87, %89 : vector<16x128xf32>
    %cst_44 = arith.constant 0.000000e+00 : f32
    %91 = vector.broadcast %cst_44 : f32 to vector<16x128xf32>
    %92 = arith.maximumf %90, %91 : vector<16x128xf32>
    %93 = tpu.iota {dimensions = array<i32: 0>} : vector<16x1xi32>
    %c7_i32 = arith.constant 7 : i32
    %94 = vector.broadcast %c7_i32 : i32 to vector<16x1xi32>
    %95 = arith.andi %93, %94 : vector<16x1xi32>
    %c0_i32_45 = arith.constant 0 : i32
    %96 = vector.broadcast %c0_i32_45 : i32 to vector<16x1xi32>
    %97 = arith.cmpi eq, %95, %96 : vector<16x1xi32>
    %c7_i32_46 = arith.constant 7 : i32
    %98 = vector.broadcast %c7_i32_46 : i32 to vector<16x1xi32>
    %99 = arith.cmpi eq, %95, %98 : vector<16x1xi32>
    %c1_i32_47 = arith.constant 1 : i32
    %100 = tpu.dynamic_rotate %92 by %c1_i32_47 dim 0 : vector<16x128xf32>, i32 -> vector<16x128xf32>
    %cst_48 = arith.constant 0.000000e+00 : f32
    %101 = vector.shape_cast %97 : vector<16x1xi1> to vector<16x1xi1>
    %102 = vector.broadcast %101 : vector<16x1xi1> to vector<16x128xi1>
    %103 = vector.broadcast %cst_48 : f32 to vector<16x128xf32>
    %104 = arith.select %102, %103, %100 : vector<16x128xi1>, vector<16x128xf32>
    %c15_i32_49 = arith.constant 15 : i32
    %105 = tpu.dynamic_rotate %92 by %c15_i32_49 dim 0 : vector<16x128xf32>, i32 -> vector<16x128xf32>
    %cst_50 = arith.constant 0.000000e+00 : f32
    %106 = vector.shape_cast %99 : vector<16x1xi1> to vector<16x1xi1>
    %107 = vector.broadcast %106 : vector<16x1xi1> to vector<16x128xi1>
    %108 = vector.broadcast %cst_50 : f32 to vector<16x128xf32>
    %109 = arith.select %107, %108, %105 : vector<16x128xi1>, vector<16x128xf32>
    %110 = arith.truncf %104 : vector<16x128xf32> to vector<16x128xbf16>
    %111 = arith.truncf %92 : vector<16x128xf32> to vector<16x128xbf16>
    %112 = arith.truncf %109 : vector<16x128xf32> to vector<16x128xbf16>
    %113 = tpu.concatenate %110, %111, %112 in 1 : vector<16x128xbf16>, vector<16x128xbf16>, vector<16x128xbf16> -> vector<16x384xbf16>
    %c0_51 = arith.constant 0 : index
    %c0_52 = arith.constant 0 : index
    %114 = vector.load %arg6[%c0_51, %c0_52] : memref<384x128xbf16, #tpu.memory_space<vmem>>, vector<384x128xbf16>
    %cst_53 = arith.constant dense<0.000000e+00> : vector<16x128xf32>
    %115 = tpu.matmul %113, %114, %cst_53 {dimension_numbers = #tpu.dot_dimension_numbers<[1], [0], [0], [1], [0, 0, 1, 1], [], []>} : vector<16x384xbf16>, vector<384x128xbf16>, vector<16x128xf32> -> vector<16x128xf32>
    %c4 = arith.constant 4 : index
    %c0_54 = arith.constant 0 : index
    %116 = vector.load %arg11[%c4, %c0_54] : memref<9x128xf32, #tpu.memory_space<vmem>>, vector<1x128xf32>
    %117 = vector.broadcast %116 : vector<1x128xf32> to vector<16x128xf32>
    %118 = arith.addf %115, %117 : vector<16x128xf32>
    %119 = arith.truncf %79 : vector<16x128xf32> to vector<16x128xbf16>
    %c0_55 = arith.constant 0 : index
    %c0_56 = arith.constant 0 : index
    %120 = vector.load %arg7[%c0_55, %c0_56] : memref<128x128xbf16, #tpu.memory_space<vmem>>, vector<128x128xbf16>
    %cst_57 = arith.constant dense<0.000000e+00> : vector<16x128xf32>
    %121 = tpu.matmul %119, %120, %cst_57 {dimension_numbers = #tpu.dot_dimension_numbers<[1], [0], [0], [1], [0, 0, 1, 1], [], []>} : vector<16x128xbf16>, vector<128x128xbf16>, vector<16x128xf32> -> vector<16x128xf32>
    %c5 = arith.constant 5 : index
    %c0_58 = arith.constant 0 : index
    %122 = vector.load %arg11[%c5, %c0_58] : memref<9x128xf32, #tpu.memory_space<vmem>>, vector<1x128xf32>
    %123 = vector.broadcast %122 : vector<1x128xf32> to vector<16x128xf32>
    %124 = arith.addf %121, %123 : vector<16x128xf32>
    %125 = arith.addf %118, %124 : vector<16x128xf32>
    %cst_59 = arith.constant 0.000000e+00 : f32
    %126 = vector.broadcast %cst_59 : f32 to vector<16x128xf32>
    %127 = arith.maximumf %125, %126 : vector<16x128xf32>
    %c1_i32_60 = arith.constant 1 : i32
    %128 = tpu.dynamic_rotate %127 by %c1_i32_60 dim 0 : vector<16x128xf32>, i32 -> vector<16x128xf32>
    %cst_61 = arith.constant 0.000000e+00 : f32
    %129 = vector.shape_cast %97 : vector<16x1xi1> to vector<16x1xi1>
    %130 = vector.broadcast %129 : vector<16x1xi1> to vector<16x128xi1>
    %131 = vector.broadcast %cst_61 : f32 to vector<16x128xf32>
    %132 = arith.select %130, %131, %128 : vector<16x128xi1>, vector<16x128xf32>
    %c15_i32_62 = arith.constant 15 : i32
    %133 = tpu.dynamic_rotate %127 by %c15_i32_62 dim 0 : vector<16x128xf32>, i32 -> vector<16x128xf32>
    %cst_63 = arith.constant 0.000000e+00 : f32
    %134 = vector.shape_cast %99 : vector<16x1xi1> to vector<16x1xi1>
    %135 = vector.broadcast %134 : vector<16x1xi1> to vector<16x128xi1>
    %136 = vector.broadcast %cst_63 : f32 to vector<16x128xf32>
    %137 = arith.select %135, %136, %133 : vector<16x128xi1>, vector<16x128xf32>
    %c0_64 = arith.constant 0 : index
    %c0_65 = arith.constant 0 : index
    %138 = vector.load %arg13[%c0_64, %c0_65] : memref<32x128xf32, #tpu.memory_space<vmem>>, vector<16x128xf32>
    tpu.vector_store %arg13[%c0_64, %c0_65], %132 {strides = array<i32>} : memref<32x128xf32, #tpu.memory_space<vmem>>, vector<16x128xf32>,
    %c0_66 = arith.constant 0 : index
    %c0_67 = arith.constant 0 : index
    %139 = tpu.strided_load %arg13[%c0_66, %c0_67] {strides = array<i32: 2, 1>} : memref<32x128xf32, #tpu.memory_space<vmem>>, vector<8x128xf32>
    %c0_68 = arith.constant 0 : index
    %c0_69 = arith.constant 0 : index
    %140 = vector.load %arg13[%c0_68, %c0_69] : memref<32x128xf32, #tpu.memory_space<vmem>>, vector<16x128xf32>
    tpu.vector_store %arg13[%c0_68, %c0_69], %127 {strides = array<i32>} : memref<32x128xf32, #tpu.memory_space<vmem>>, vector<16x128xf32>,
    %c0_70 = arith.constant 0 : index
    %c0_71 = arith.constant 0 : index
    %141 = tpu.strided_load %arg13[%c0_70, %c0_71] {strides = array<i32: 2, 1>} : memref<32x128xf32, #tpu.memory_space<vmem>>, vector<8x128xf32>
    %c0_72 = arith.constant 0 : index
    %c0_73 = arith.constant 0 : index
    %142 = vector.load %arg13[%c0_72, %c0_73] : memref<32x128xf32, #tpu.memory_space<vmem>>, vector<16x128xf32>
    tpu.vector_store %arg13[%c0_72, %c0_73], %137 {strides = array<i32>} : memref<32x128xf32, #tpu.memory_space<vmem>>, vector<16x128xf32>,
    %c0_74 = arith.constant 0 : index
    %c0_75 = arith.constant 0 : index
    %143 = tpu.strided_load %arg13[%c0_74, %c0_75] {strides = array<i32: 2, 1>} : memref<32x128xf32, #tpu.memory_space<vmem>>, vector<8x128xf32>
    %144 = arith.truncf %139 : vector<8x128xf32> to vector<8x128xbf16>
    %145 = arith.truncf %141 : vector<8x128xf32> to vector<8x128xbf16>
    %146 = arith.truncf %143 : vector<8x128xf32> to vector<8x128xbf16>
    %147 = tpu.concatenate %144, %145, %146 in 1 : vector<8x128xbf16>, vector<8x128xbf16>, vector<8x128xbf16> -> vector<8x384xbf16>
    %c0_76 = arith.constant 0 : index
    %c0_77 = arith.constant 0 : index
    %148 = vector.load %arg8[%c0_76, %c0_77] : memref<384x128xbf16, #tpu.memory_space<vmem>>, vector<384x128xbf16>
    %cst_78 = arith.constant dense<0.000000e+00> : vector<8x128xf32>
    %149 = tpu.matmul %147, %148, %cst_78 {dimension_numbers = #tpu.dot_dimension_numbers<[1], [0], [0], [1], [0, 0, 1, 1], [], []>} : vector<8x384xbf16>, vector<384x128xbf16>, vector<8x128xf32> -> vector<8x128xf32>
    %c6 = arith.constant 6 : index
    %c0_79 = arith.constant 0 : index
    %150 = vector.load %arg11[%c6, %c0_79] : memref<9x128xf32, #tpu.memory_space<vmem>>, vector<1x128xf32>
    %151 = vector.broadcast %150 : vector<1x128xf32> to vector<8x128xf32>
    %152 = arith.addf %149, %151 : vector<8x128xf32>
    %cst_80 = arith.constant 0.000000e+00 : f32
    %153 = vector.broadcast %cst_80 : f32 to vector<8x128xf32>
    %154 = arith.maximumf %152, %153 : vector<8x128xf32>
    %155 = tpu.iota {dimensions = array<i32: 0>} : vector<8x1xi32>
    %c3_i32 = arith.constant 3 : i32
    %156 = vector.broadcast %c3_i32 : i32 to vector<8x1xi32>
    %157 = arith.andi %155, %156 : vector<8x1xi32>
    %c0_i32_81 = arith.constant 0 : i32
    %158 = vector.broadcast %c0_i32_81 : i32 to vector<8x1xi32>
    %159 = arith.cmpi eq, %157, %158 : vector<8x1xi32>
    %c3_i32_82 = arith.constant 3 : i32
    %160 = vector.broadcast %c3_i32_82 : i32 to vector<8x1xi32>
    %161 = arith.cmpi eq, %157, %160 : vector<8x1xi32>
    %c1_i32_83 = arith.constant 1 : i32
    %162 = tpu.dynamic_rotate %154 by %c1_i32_83 dim 0 : vector<8x128xf32>, i32 -> vector<8x128xf32>
    %cst_84 = arith.constant 0.000000e+00 : f32
    %163 = vector.shape_cast %159 : vector<8x1xi1> to vector<8x1xi1>
    %164 = vector.broadcast %163 : vector<8x1xi1> to vector<8x128xi1>
    %165 = vector.broadcast %cst_84 : f32 to vector<8x128xf32>
    %166 = arith.select %164, %165, %162 : vector<8x128xi1>, vector<8x128xf32>
    %c7_i32_85 = arith.constant 7 : i32
    %167 = tpu.dynamic_rotate %154 by %c7_i32_85 dim 0 : vector<8x128xf32>, i32 -> vector<8x128xf32>
    %cst_86 = arith.constant 0.000000e+00 : f32
    %168 = vector.shape_cast %161 : vector<8x1xi1> to vector<8x1xi1>
    %169 = vector.broadcast %168 : vector<8x1xi1> to vector<8x128xi1>
    %170 = vector.broadcast %cst_86 : f32 to vector<8x128xf32>
    %171 = arith.select %169, %170, %167 : vector<8x128xi1>, vector<8x128xf32>
    %172 = arith.truncf %166 : vector<8x128xf32> to vector<8x128xbf16>
    %173 = arith.truncf %154 : vector<8x128xf32> to vector<8x128xbf16>
    %174 = arith.truncf %171 : vector<8x128xf32> to vector<8x128xbf16>
    %175 = tpu.concatenate %172, %173, %174 in 1 : vector<8x128xbf16>, vector<8x128xbf16>, vector<8x128xbf16> -> vector<8x384xbf16>
    %c0_87 = arith.constant 0 : index
    %c0_88 = arith.constant 0 : index
    %176 = vector.load %arg9[%c0_87, %c0_88] : memref<384x128xbf16, #tpu.memory_space<vmem>>, vector<384x128xbf16>
    %cst_89 = arith.constant dense<0.000000e+00> : vector<8x128xf32>
    %177 = tpu.matmul %175, %176, %cst_89 {dimension_numbers = #tpu.dot_dimension_numbers<[1], [0], [0], [1], [0, 0, 1, 1], [], []>} : vector<8x384xbf16>, vector<384x128xbf16>, vector<8x128xf32> -> vector<8x128xf32>
    %c7 = arith.constant 7 : index
    %c0_90 = arith.constant 0 : index
    %178 = vector.load %arg11[%c7, %c0_90] : memref<9x128xf32, #tpu.memory_space<vmem>>, vector<1x128xf32>
    %179 = vector.broadcast %178 : vector<1x128xf32> to vector<8x128xf32>
    %180 = arith.addf %177, %179 : vector<8x128xf32>
    %181 = arith.truncf %141 : vector<8x128xf32> to vector<8x128xbf16>
    %c0_91 = arith.constant 0 : index
    %c0_92 = arith.constant 0 : index
    %182 = vector.load %arg10[%c0_91, %c0_92] : memref<128x128xbf16, #tpu.memory_space<vmem>>, vector<128x128xbf16>
    %cst_93 = arith.constant dense<0.000000e+00> : vector<8x128xf32>
    %183 = tpu.matmul %181, %182, %cst_93 {dimension_numbers = #tpu.dot_dimension_numbers<[1], [0], [0], [1], [0, 0, 1, 1], [], []>} : vector<8x128xbf16>, vector<128x128xbf16>, vector<8x128xf32> -> vector<8x128xf32>
    %c8 = arith.constant 8 : index
    %c0_94 = arith.constant 0 : index
    %184 = vector.load %arg11[%c8, %c0_94] : memref<9x128xf32, #tpu.memory_space<vmem>>, vector<1x128xf32>
    %185 = vector.broadcast %184 : vector<1x128xf32> to vector<8x128xf32>
    %186 = arith.addf %183, %185 : vector<8x128xf32>
    %187 = arith.addf %180, %186 : vector<8x128xf32>
    %cst_95 = arith.constant 0.000000e+00 : f32
    %188 = vector.broadcast %cst_95 : f32 to vector<8x128xf32>
    %189 = arith.maximumf %187, %188 : vector<8x128xf32>
    %c0_96 = arith.constant 0 : index
    %c0_97 = arith.constant 0 : index
    %190 = vector.load %arg12[%c0_96, %c0_97] : memref<8x128xf32, #tpu.memory_space<vmem>>, vector<8x128xf32>
    tpu.vector_store %arg12[%c0_96, %c0_97], %189 {strides = array<i32>} : memref<8x128xf32, #tpu.memory_space<vmem>>, vector<8x128xf32>,
    return
  }
  func.func @transform_0(%arg0: i32) -> (i32, i32) {
    %c0_i32 = arith.constant 0 : i32
    %c0_i32_0 = arith.constant 0 : i32
    return %arg0, %c0_i32 : i32, i32
  }
  func.func @transform_1(%arg0: i32) -> (i32, i32) {
    %c0_i32 = arith.constant 0 : i32
    %c0_i32_0 = arith.constant 0 : i32
    %c0_i32_1 = arith.constant 0 : i32
    return %c0_i32, %c0_i32_0 : i32, i32
  }
  func.func @transform_2(%arg0: i32) -> (i32, i32) {
    %c0_i32 = arith.constant 0 : i32
    %c0_i32_0 = arith.constant 0 : i32
    %c0_i32_1 = arith.constant 0 : i32
    return %c0_i32, %c0_i32_0 : i32, i32
  }
  func.func @transform_3(%arg0: i32) -> (i32, i32) {
    %c0_i32 = arith.constant 0 : i32
    %c0_i32_0 = arith.constant 0 : i32
    %c0_i32_1 = arith.constant 0 : i32
    return %c0_i32, %c0_i32_0 : i32, i32
  }
  func.func @transform_4(%arg0: i32) -> (i32, i32) {
    %c0_i32 = arith.constant 0 : i32
    %c0_i32_0 = arith.constant 0 : i32
    %c0_i32_1 = arith.constant 0 : i32
    return %c0_i32, %c0_i32_0 : i32, i32
  }
  func.func @transform_5(%arg0: i32) -> (i32, i32) {
    %c0_i32 = arith.constant 0 : i32
    %c0_i32_0 = arith.constant 0 : i32
    %c0_i32_1 = arith.constant 0 : i32
    return %c0_i32, %c0_i32_0 : i32, i32
  }
  func.func @transform_6(%arg0: i32) -> (i32, i32) {
    %c0_i32 = arith.constant 0 : i32
    %c0_i32_0 = arith.constant 0 : i32
    %c0_i32_1 = arith.constant 0 : i32
    return %c0_i32, %c0_i32_0 : i32, i32
  }
  func.func @transform_7(%arg0: i32) -> (i32, i32) {
    %c0_i32 = arith.constant 0 : i32
    %c0_i32_0 = arith.constant 0 : i32
    %c0_i32_1 = arith.constant 0 : i32
    return %c0_i32, %c0_i32_0 : i32, i32
  }
  func.func @transform_8(%arg0: i32) -> (i32, i32) {
    %c0_i32 = arith.constant 0 : i32
    %c0_i32_0 = arith.constant 0 : i32
    %c0_i32_1 = arith.constant 0 : i32
    return %c0_i32, %c0_i32_0 : i32, i32
  }
  func.func @transform_9(%arg0: i32) -> (i32, i32) {
    %c0_i32 = arith.constant 0 : i32
    %c0_i32_0 = arith.constant 0 : i32
    %c0_i32_1 = arith.constant 0 : i32
    return %c0_i32, %c0_i32_0 : i32, i32
  }
  func.func @transform_10(%arg0: i32) -> (i32, i32) {
    %c0_i32 = arith.constant 0 : i32
    %c0_i32_0 = arith.constant 0 : i32
    %c0_i32_1 = arith.constant 0 : i32
    return %c0_i32, %c0_i32_0 : i32, i32
  }
  func.func @transform_11(%arg0: i32) -> (i32, i32) {
    %c0_i32 = arith.constant 0 : i32
    %c0_i32_0 = arith.constant 0 : i32
    return %arg0, %c0_i32 : i32, i32
  }
}

</mosaic_0001>

<llo_original>
// kernel: tpu_custom_call.1
$region0: #{tpu_custom_call.1}
  #allocation0 [shape = 'u32[]', space=smem, size = 0x4, offset = 0x4, fixed_abs, tag = 'smem constant byte address 0x4 - core index']
  #allocation1 [shape = 'u32[144,128]{1,0:T(1,128)}', space=vmem, size = 0x12000, scoped, tag = 'internal scratch']
  #allocation2 [shape = 'f32[32,128]{1,0:T(8,128)}', space=vmem, size = 0x4000, scoped, tag = 'scratch operand']
  %s0 = inlined_call_operand.hbm [shape: f32[32,8], index: 0, kind: input, shape index: {}]
  %s1 = inlined_call_operand.hbm [shape: f32[24,128], index: 1, kind: input, shape index: {}]
  %s2 = inlined_call_operand.hbm [shape: bf16[384,128], index: 2, kind: input, shape index: {}]
  %s3 = inlined_call_operand.hbm [shape: bf16[8,128], index: 3, kind: input, shape index: {}]
  %s4 = inlined_call_operand.hbm [shape: bf16[384,128], index: 4, kind: input, shape index: {}]
  %s5 = inlined_call_operand.hbm [shape: bf16[384,128], index: 5, kind: input, shape index: {}]
  %s6 = inlined_call_operand.hbm [shape: bf16[128,128], index: 6, kind: input, shape index: {}]
  %s7 = inlined_call_operand.hbm [shape: bf16[384,128], index: 7, kind: input, shape index: {}]
  %s8 = inlined_call_operand.hbm [shape: bf16[384,128], index: 8, kind: input, shape index: {}]
  %s9 = inlined_call_operand.hbm [shape: bf16[128,128], index: 9, kind: input, shape index: {}]
  %s10 = inlined_call_operand.hbm [shape: f32[9,128], index: 10, kind: input, shape index: {}]
  %s11 = inlined_call_operand.hbm [shape: f32[8,128], index: 11, kind: output, shape index: {}]
  %s12 = sld [smem:[#allocation0]]
  $region98: #{tpu_custom_call.1} parent=0
    _
  %s14 = ssub.s32 1, %s12
  %s15 = scalar_select 0, %s14, %s12
  $region1: #{tpu_custom_call.1} parent=0
    #allocation3 [shape = 'u8[16384]{0}', space=vmem, size = 0x4000, scoped, tag = 'input window, operand 0, single buffered']
    #allocation4 [shape = 's32[1]{0}', space=sflag, size = 0x4, scoped, tag = 'scoped memory for tpu_custom_call.1']
    #allocation5 [shape = 's32[1]{0}', space=sflag, size = 0x4, scoped, tag = 'scoped memory for tpu_custom_call.1']
    #allocation6 [shape = 'u8[12288]{0}', space=vmem, size = 0x3000, scoped, tag = 'input window, operand 1, single buffered']
    #allocation7 [shape = 's32[1]{0}', space=sflag, size = 0x4, scoped, tag = 'scoped memory for tpu_custom_call.1']
    #allocation8 [shape = 'u8[98304]{0}', space=vmem, size = 0x18000, scoped, tag = 'input window, operand 2, single buffered']
    #allocation9 [shape = 'u8[2048]{0}', space=vmem, size = 0x800, scoped, tag = 'input window, operand 3, single buffered']
    #allocation10 [shape = 's32[1]{0}', space=sflag, size = 0x4, scoped, tag = 'scoped memory for tpu_custom_call.1']
    #allocation11 [shape = 'u8[98304]{0}', space=vmem, size = 0x18000, scoped, tag = 'input window, operand 4, single buffered']
    #allocation12 [shape = 'u8[98304]{0}', space=vmem, size = 0x18000, scoped, tag = 'input window, operand 5, single buffered']
    #allocation13 [shape = 's32[1]{0}', space=sflag, size = 0x4, scoped, tag = 'scoped memory for tpu_custom_call.1']
    #allocation14 [shape = 'u8[32768]{0}', space=vmem, size = 0x8000, scoped, tag = 'input window, operand 6, single buffered']
    #allocation15 [shape = 'u8[98304]{0}', space=vmem, size = 0x18000, scoped, tag = 'input window, operand 7, single buffered']
    #allocation16 [shape = 's32[1]{0}', space=sflag, size = 0x4, scoped, tag = 'scoped memory for tpu_custom_call.1']
    #allocation17 [shape = 'u8[98304]{0}', space=vmem, size = 0x18000, scoped, tag = 'input window, operand 8, single buffered']
    #allocation18 [shape = 'u8[32768]{0}', space=vmem, size = 0x8000, scoped, tag = 'input window, operand 9, single buffered']
    #allocation19 [shape = 's32[1]{0}', space=sflag, size = 0x4, scoped, tag = 'scoped memory for tpu_custom_call.1']
    #allocation20 [shape = 'u8[8192]{0}', space=vmem, size = 0x2000, scoped, tag = 'input window, operand 10, single buffered']
    #allocation21 [shape = 'u8[4096]{0}', space=vmem, size = 0x1000, scoped, tag = 'output window, operand 0, single buffered']
    %16 = vsyncpa [#allocation4], 0
    %17 = vsyncpa [#allocation7], 0
    %18 = vsyncpa [#allocation10], 0
    %19 = vsyncpa [#allocation13], 0
    %20 = vsyncpa [#allocation16], 0
    %21 = vsyncpa [#allocation19], 0
    %22 = vsyncpa [#allocation5], 0
    // Predicated region
    $region2: #{tpu_custom_call.1} parent=1 // pred_check
      _
    $region3: #{tpu_custom_call.1} parent=1 // pred_check_branch
      %24 = sbr.rel (0) target = $region5
    $region4: #{tpu_custom_call.1} parent=1 // pred_region
      %s26 = ssub.s32 512, 512
      %27 = vsyncadd [#allocation4], %s26
      %s28 = sshll.u32 [#allocation3], 4
      %s29 = int_to_ptr.vmem [resolvable:$true] %s28
      %34 = dma.hbm_to_vmem [thread:$0]  %s0, 512, %s29, [#allocation4], 128, 128, 8
    $region5: #{tpu_custom_call.1} parent=1 // pred_fallthru
      _
    // Predicated region
    $region6: #{tpu_custom_call.1} parent=1 // pred_check
      _
    $region7: #{tpu_custom_call.1} parent=1 // pred_check_branch
      %36 = sbr.rel (0) target = $region9
    $region8: #{tpu_custom_call.1} parent=1 // pred_region
      %s38 = ssub.s32 384, 384
      %39 = vsyncadd [#allocation7], %s38
      %s40 = sshll.u32 [#allocation6], 4
      %s41 = int_to_ptr.vmem [resolvable:$true] %s40
      %46 = dma.hbm_to_vmem [thread:$0]  %s1, 384, %s41, [#allocation7], 128, 128, 8
    $region9: #{tpu_custom_call.1} parent=1 // pred_fallthru
      _
    // Predicated region
    $region10: #{tpu_custom_call.1} parent=1 // pred_check
      _
    $region11: #{tpu_custom_call.1} parent=1 // pred_check_branch
      %48 = sbr.rel (0) target = $region13
    $region12: #{tpu_custom_call.1} parent=1 // pred_region
      %s50 = ssub.s32 3072, 3072
      %51 = vsyncadd [#allocation7], %s50
      %s52 = sshll.u32 [#allocation8], 4
      %s53 = int_to_ptr.vmem [resolvable:$true] %s52
      %58 = dma.hbm_to_vmem [thread:$0]  %s2, 3072, %s53, [#allocation7], 64, 64, 4
    $region13: #{tpu_custom_call.1} parent=1 // pred_fallthru
      _
    // Predicated region
    $region14: #{tpu_custom_call.1} parent=1 // pred_check
      _
    $region15: #{tpu_custom_call.1} parent=1 // pred_check_branch
      %60 = sbr.rel (0) target = $region17
    $region16: #{tpu_custom_call.1} parent=1 // pred_region
      %s62 = ssub.s32 64, 64
      %63 = vsyncadd [#allocation10], %s62
      %s65 = sshll.u32 [#allocation9], 4
      %s66 = int_to_ptr.vmem [resolvable:$true] %s65
      %68 = dma.hbm_to_vmem [thread:$0]  %s3, 64, %s66, [#allocation10]
    $region17: #{tpu_custom_call.1} parent=1 // pred_fallthru
      _
    // Predicated region
    $region18: #{tpu_custom_call.1} parent=1 // pred_check
      _
    $region19: #{tpu_custom_call.1} parent=1 // pred_check_branch
      %70 = sbr.rel (0) target = $region21
    $region20: #{tpu_custom_call.1} parent=1 // pred_region
      %s72 = ssub.s32 3072, 3072
      %73 = vsyncadd [#allocation10], %s72
      %s74 = sshll.u32 [#allocation11], 4
      %s75 = int_to_ptr.vmem [resolvable:$true] %s74
      %80 = dma.hbm_to_vmem [thread:$0]  %s4, 3072, %s75, [#allocation10], 64, 64, 4
    $region21: #{tpu_custom_call.1} parent=1 // pred_fallthru
      _
    // Predicated region
    $region22: #{tpu_custom_call.1} parent=1 // pred_check
      _
    $region23: #{tpu_custom_call.1} parent=1 // pred_check_branch
      %82 = sbr.rel (0) target = $region25
    $region24: #{tpu_custom_call.1} parent=1 // pred_region
      %s84 = ssub.s32 3072, 3072
      %85 = vsyncadd [#allocation13], %s84
      %s86 = sshll.u32 [#allocation12], 4
      %s87 = int_to_ptr.vmem [resolvable:$true] %s86
      %92 = dma.hbm_to_vmem [thread:$0]  %s5, 3072, %s87, [#allocation13], 64, 64, 4
    $region25: #{tpu_custom_call.1} parent=1 // pred_fallthru
      _
    // Predicated region
    $region26: #{tpu_custom_call.1} parent=1 // pred_check
      _
    $region27: #{tpu_custom_call.1} parent=1 // pred_check_branch
      %94 = sbr.rel (0) target = $region29
    $region28: #{tpu_custom_call.1} parent=1 // pred_region
      %s96 = ssub.s32 1024, 1024
      %97 = vsyncadd [#allocation13], %s96
      %s98 = sshll.u32 [#allocation14], 4
      %s99 = int_to_ptr.vmem [resolvable:$true] %s98
      %104 = dma.hbm_to_vmem [thread:$0]  %s6, 1024, %s99, [#allocation13], 64, 64, 4
    $region29: #{tpu_custom_call.1} parent=1 // pred_fallthru
      _
    // Predicated region
    $region30: #{tpu_custom_call.1} parent=1 // pred_check
      _
    $region31: #{tpu_custom_call.1} parent=1 // pred_check_branch
      %106 = sbr.rel (0) target = $region33
    $region32: #{tpu_custom_call.1} parent=1 // pred_region
      %s108 = ssub.s32 3072, 3072
      %109 = vsyncadd [#allocation16], %s108
      %s110 = sshll.u32 [#allocation15], 4
      %s111 = int_to_ptr.vmem [resolvable:$true] %s110
      %116 = dma.hbm_to_vmem [thread:$0]  %s7, 3072, %s111, [#allocation16], 64, 64, 4
    $region33: #{tpu_custom_call.1} parent=1 // pred_fallthru
      _
    // Predicated region
    $region34: #{tpu_custom_call.1} parent=1 // pred_check
      _
    $region35: #{tpu_custom_call.1} parent=1 // pred_check_branch
      %118 = sbr.rel (0) target = $region37
    $region36: #{tpu_custom_call.1} parent=1 // pred_region
      %s120 = ssub.s32 3072, 3072
      %121 = vsyncadd [#allocation16], %s120
      %s122 = sshll.u32 [#allocation17], 4
      %s123 = int_to_ptr.vmem [resolvable:$true] %s122
      %128 = dma.hbm_to_vmem [thread:$0]  %s8, 3072, %s123, [#allocation16], 64, 64, 4
    $region37: #{tpu_custom_call.1} parent=1 // pred_fallthru
      _
    // Predicated region
    $region38: #{tpu_custom_call.1} parent=1 // pred_check
      _
    $region39: #{tpu_custom_call.1} parent=1 // pred_check_branch
      %130 = sbr.rel (0) target = $region41
    $region40: #{tpu_custom_call.1} parent=1 // pred_region
      %s132 = ssub.s32 1024, 1024
      %133 = vsyncadd [#allocation19], %s132
      %s134 = sshll.u32 [#allocation18], 4
      %s135 = int_to_ptr.vmem [resolvable:$true] %s134
      %140 = dma.hbm_to_vmem [thread:$0]  %s9, 1024, %s135, [#allocation19], 64, 64, 4
    $region41: #{tpu_custom_call.1} parent=1 // pred_fallthru
      _
    // Predicated region
    $region42: #{tpu_custom_call.1} parent=1 // pred_check
      _
    $region43: #{tpu_custom_call.1} parent=1 // pred_check_branch
      %142 = sbr.rel (0) target = $region45
    $region44: #{tpu_custom_call.1} parent=1 // pred_region
      %s144 = ssub.s32 256, 256
      %145 = vsyncadd [#allocation19], %s144
      %s146 = sshll.u32 [#allocation20], 4
      %s147 = int_to_ptr.vmem [resolvable:$true] %s146
      %152 = dma.hbm_to_vmem [thread:$0]  %s10, 256, %s147, [#allocation19], 128, 128, 8
    $region45: #{tpu_custom_call.1} parent=1 // pred_fallthru
      _
    // Predicated region
    $region46: #{tpu_custom_call.1} parent=1 // pred_check
      _
    $region47: #{tpu_custom_call.1} parent=1 // pred_check_branch
      %154 = sbr.rel (0) target = $region49
    $region48: #{tpu_custom_call.1} parent=1 // pred_region
      %155 = dma.done [#allocation4], 512
    $region49: #{tpu_custom_call.1} parent=1 // pred_fallthru
      _
    // Predicated region
    $region50: #{tpu_custom_call.1} parent=1 // pred_check
      _
    $region51: #{tpu_custom_call.1} parent=1 // pred_check_branch
      %157 = sbr.rel (0) target = $region53
    $region52: #{tpu_custom_call.1} parent=1 // pred_region
      %158 = dma.done [#allocation7], 384
    $region53: #{tpu_custom_call.1} parent=1 // pred_fallthru
      _
    // Predicated region
    $region54: #{tpu_custom_call.1} parent=1 // pred_check
      _
    $region55: #{tpu_custom_call.1} parent=1 // pred_check_branch
      %160 = sbr.rel (0) target = $region57
    $region56: #{tpu_custom_call.1} parent=1 // pred_region
      %161 = dma.done [#allocation7], 3072
    $region57: #{tpu_custom_call.1} parent=1 // pred_fallthru
      _
    // Predicated region
    $region58: #{tpu_custom_call.1} parent=1 // pred_check
      _
    $region59: #{tpu_custom_call.1} parent=1 // pred_check_branch
      %163 = sbr.rel (0) target = $region61
    $region60: #{tpu_custom_call.1} parent=1 // pred_region
      %164 = dma.done [#allocation10], 64
    $region61: #{tpu_custom_call.1} parent=1 // pred_fallthru
      _
    // Predicated region
    $region62: #{tpu_custom_call.1} parent=1 // pred_check
      _
    $region63: #{tpu_custom_call.1} parent=1 // pred_check_branch
      %166 = sbr.rel (0) target = $region65
    $region64: #{tpu_custom_call.1} parent=1 // pred_region
      %167 = dma.done [#allocation10], 3072
    $region65: #{tpu_custom_call.1} parent=1 // pred_fallthru
      _
    // Predicated region
    $region66: #{tpu_custom_call.1} parent=1 // pred_check
      _
    $region67: #{tpu_custom_call.1} parent=1 // pred_check_branch
      %169 = sbr.rel (0) target = $region69
    $region68: #{tpu_custom_call.1} parent=1 // pred_region
      %170 = dma.done [#allocation13], 3072
    $region69: #{tpu_custom_call.1} parent=1 // pred_fallthru
      _
    // Predicated region
    $region70: #{tpu_custom_call.1} parent=1 // pred_check
      _
    $region71: #{tpu_custom_call.1} parent=1 // pred_check_branch
      %172 = sbr.rel (0) target = $region73
    $region72: #{tpu_custom_call.1} parent=1 // pred_region
      %173 = dma.done [#allocation13], 1024
    $region73: #{tpu_custom_call.1} parent=1 // pred_fallthru
      _
    // Predicated region
    $region74: #{tpu_custom_call.1} parent=1 // pred_check
      _
    $region75: #{tpu_custom_call.1} parent=1 // pred_check_branch
      %175 = sbr.rel (0) target = $region77
    $region76: #{tpu_custom_call.1} parent=1 // pred_region
      %176 = dma.done [#allocation16], 3072
    $region77: #{tpu_custom_call.1} parent=1 // pred_fallthru
      _
    // Predicated region
    $region78: #{tpu_custom_call.1} parent=1 // pred_check
      _
    $region79: #{tpu_custom_call.1} parent=1 // pred_check_branch
      %178 = sbr.rel (0) target = $region81
    $region80: #{tpu_custom_call.1} parent=1 // pred_region
      %179 = dma.done [#allocation16], 3072
    $region81: #{tpu_custom_call.1} parent=1 // pred_fallthru
      _
    // Predicated region
    $region82: #{tpu_custom_call.1} parent=1 // pred_check
      _
    $region83: #{tpu_custom_call.1} parent=1 // pred_check_branch
      %181 = sbr.rel (0) target = $region85
    $region84: #{tpu_custom_call.1} parent=1 // pred_region
      %182 = dma.done [#allocation19], 1024
    $region85: #{tpu_custom_call.1} parent=1 // pred_fallthru
      _
    // Predicated region
    $region86: #{tpu_custom_call.1} parent=1 // pred_check
      _
    $region87: #{tpu_custom_call.1} parent=1 // pred_check_branch
      %184 = sbr.rel (0) target = $region89
    $region88: #{tpu_custom_call.1} parent=1 // pred_region
      %185 = dma.done [#allocation19], 256
    $region89: #{tpu_custom_call.1} parent=1 // pred_fallthru
      _
    %v187 = vld [vmem:[#allocation3] sm:$0xff]
    %v188 = vld [vmem:[#allocation3 + $0x8] sm:$0xff]
    %v189 = vld [vmem:[#allocation3 + $0x10] sm:$0xff]
    %v190 = vld [vmem:[#allocation3 + $0x18] sm:$0xff]
    %v191 = vlaneseq
    %v192 = vshrl.u32 %v191, 7
    %v193 = vadd.s32 %v192, 8
    %v194 = vadd.s32 %v192, 16
    %v195 = vadd.s32 %v192, 24
    %v196 = vand.u32 %v192, 15
    %v197 = vand.u32 %v193, 15
    %v198 = vand.u32 %v194, 15
    %v199 = vand.u32 %v195, 15
    %vm200 = vcmp.eq.s32.totalorder %v196, 0
    %vm201 = vcmp.eq.s32.totalorder %v197, 0
    %vm202 = vcmp.eq.s32.totalorder %v198, 0
    %vm203 = vcmp.eq.s32.totalorder %v199, 0
    %vm204 = vcmp.eq.s32.totalorder %v196, 15
    %vm205 = vcmp.eq.s32.totalorder %v197, 15
    %vm206 = vcmp.eq.s32.totalorder %v198, 15
    %vm207 = vcmp.eq.s32.totalorder %v199, 15
    %v208 = vrot.slane %v187, 7
    %v209 = vrot.slane %v188, 7
    %v210 = vrot.slane %v189, 7
    %v211 = vrot.slane %v190, 7
    %vm212 = vcmp.lt.s32.totalorder %v192, 1
    %v213 = vsel %vm212, %v210, %v211
    %v214 = vsel %vm212, %v209, %v210
    %v215 = vsel %vm212, %v208, %v209
    %v216 = vsel %vm212, %v211, %v208
    %v217 = vsel %vm200, 1, 0
    %v218 = vsel %vm201, 1, 0
    %v219 = vsel %vm202, 1, 0
    %v220 = vsel %vm203, 1, 0
    %vm221 = vcmp.eq.s32.totalorder %v217, 1
    %vm222 = vcmp.eq.s32.totalorder %v218, 1
    %vm223 = vcmp.eq.s32.totalorder %v219, 1
    %vm224 = vcmp.eq.s32.totalorder %v220, 1
    %v225 = vsel %vm221, 0.0, %v216
    %v226 = vsel %vm222, 0.0, %v215
    %v227 = vsel %vm223, 0.0, %v214
    %v228 = vsel %vm224, 0.0, %v213
    %v229 = vrot.slane %v187, 1
    %v230 = vrot.slane %v188, 1
    %v231 = vrot.slane %v189, 1
    %v232 = vrot.slane %v190, 1
    %vm233 = vcmp.lt.s32.totalorder %v192, 7
    %v234 = vsel %vm233, %v231, %v232
    %v235 = vsel %vm233, %v230, %v231
    %v236 = vsel %vm233, %v229, %v230
    %v237 = vsel %vm233, %v232, %v229
    %v238 = vsel %vm204, 1, 0
    %v239 = vsel %vm205, 1, 0
    %v240 = vsel %vm206, 1, 0
    %v241 = vsel %vm207, 1, 0
    %vm242 = vcmp.eq.s32.totalorder %v238, 1
    %vm243 = vcmp.eq.s32.totalorder %v239, 1
    %vm244 = vcmp.eq.s32.totalorder %v240, 1
    %vm245 = vcmp.eq.s32.totalorder %v241, 1
    %v246 = vsel %vm242, 0.0, %v236
    %v247 = vsel %vm243, 0.0, %v235
    %v248 = vsel %vm244, 0.0, %v234
    %v249 = vsel %vm245, 0.0, %v237
    %v250 = vld [vmem:[#allocation6] sm:$0xff]
    %v251 = vld [vmem:[#allocation6 + $0x8] sm:$0xff]
    %v252 = vld [vmem:[#allocation6 + $0x10] sm:$0xff]
    %v253 = vpack.c.bf16 %v226, %v225
    %v254 = vpack.c.bf16 %v228, %v227
    %v255 = vpack.c.bf16 %v250, %v250
    %v256 = vpack.c.bf16 %v188, %v187
    %v257 = vpack.c.bf16 %v190, %v189
    %v258 = vpack.c.bf16 %v251, %v251
    %vm259 = vcmask 64512
    %v261 = vsel %vm259, %v256, 0
    %v264 = vsel %vm259, %v257, 0
    %vm266 = vcmask 1043456
    %v268 = vsel %vm266, %v258, 0
    %270 = vmatprep.subr.bf16.mxu0 0
    %271 = vmatpush1.bf16.msra.mxu0 %v268
    %272 = vmatprep.subr.bf16.mxu0 0
    %273 = vmatpush1.bf16.msra.mxu0 0
    %274 = vmatprep.subr.bf16.mxu0 0
    %275 = vmatpush1.bf16.msra.mxu0 0
    %276 = vmatprep.subr.bf16.mxu0 0
    %277 = vmatpush1.bf16.msra.mxu0 0
    %278 = vmatprep.subr.bf16.mxu0 0
    %279 = vmatpush1.bf16.msra.mxu0 0
    %280 = vmatprep.subr.bf16.mxu0 0
    %281 = vmatpush1.bf16.msra.mxu0 0
    %282 = vmatprep.subr.bf16.mxu0 0
    %283 = vmatpush1.bf16.msra.mxu0 0
    %284 = vmatprep.subr.bf16.mxu0 0
    %285 = vmatpush1.bf16.msra.mxu0 0
    %286 = vmatprep.subr.bf16.mxu0 0
    %287 = vmatpush1.bf16.msra.mxu0 0
    %288 = vmatprep.subr.bf16.mxu0 0
    %289 = vmatpush1.bf16.msra.mxu0 0
    %290 = vmatprep.subr.bf16.mxu0 0
    %291 = vmatpush1.bf16.msra.mxu0 0
    %292 = vmatprep.subr.bf16.mxu0 0
    %293 = vmatpush1.bf16.msra.mxu0 0
    %294 = vmatprep.subr.bf16.mxu0 0
    %295 = vmatpush1.bf16.msra.mxu0 0
    %296 = vmatprep.subr.bf16.mxu0 0
    %297 = vmatpush1.bf16.msra.mxu0 0
    %298 = vmatprep.subr.bf16.mxu0 0
    %299 = vmatpush1.bf16.msra.mxu0 0
    %300 = vmatprep.subr.bf16.mxu0 0
    %301 = vmatpush1.bf16.msra.mxu0 0
    %302 = vmatprep.mubr.bf16.mxu0 0
    %303 = vmatmul.mubr.bf16.gmra.mrb[0].mxu0 %v261
    %v304 = vpop.f32.mrb[0].mxu0
    %v305 = vadd.f32 0.0, %v304
    %v306 = vpop.f32.mrb[0].mxu0
    %v307 = vpop.f32.mrb[0].mxu0
    %v308 = vadd.f32 0.0, %v307
    %v309 = vpop.f32.mrb[0].mxu0
    %310 = vmatprep.mubr.bf16.mxu0 0
    %311 = vmatmul.mubr.bf16.gmra.mrb[0].mxu0 %v264
    %v312 = vpop.f32.mrb[0].mxu0
    %v313 = vadd.f32 0.0, %v312
    %v314 = vpop.f32.mrb[0].mxu0
    %v315 = vpop.f32.mrb[0].mxu0
    %v316 = vadd.f32 0.0, %v315
    %v317 = vpop.f32.mrb[0].mxu0
    %318 = vdwg.mxu0
    %v320 = vsel %vm259, %v253, 0
    %v323 = vsel %vm259, %v254, 0
    %v326 = vsel %vm266, %v255, 0
    %328 = vmatprep.subr.bf16.mxu0 0
    %329 = vmatpush1.bf16.msra.mxu0 %v326
    %330 = vmatprep.subr.bf16.mxu0 0
    %331 = vmatpush1.bf16.msra.mxu0 0
    %332 = vmatprep.subr.bf16.mxu0 0
    %333 = vmatpush1.bf16.msra.mxu0 0
    %334 = vmatprep.subr.bf16.mxu0 0
    %335 = vmatpush1.bf16.msra.mxu0 0
    %336 = vmatprep.subr.bf16.mxu0 0
    %337 = vmatpush1.bf16.msra.mxu0 0
    %338 = vmatprep.subr.bf16.mxu0 0
    %339 = vmatpush1.bf16.msra.mxu0 0
    %340 = vmatprep.subr.bf16.mxu0 0
    %341 = vmatpush1.bf16.msra.mxu0 0
    %342 = vmatprep.subr.bf16.mxu0 0
    %343 = vmatpush1.bf16.msra.mxu0 0
    %344 = vmatprep.subr.bf16.mxu0 0
    %345 = vmatpush1.bf16.msra.mxu0 0
    %346 = vmatprep.subr.bf16.mxu0 0
    %347 = vmatpush1.bf16.msra.mxu0 0
    %348 = vmatprep.subr.bf16.mxu0 0
    %349 = vmatpush1.bf16.msra.mxu0 0
    %350 = vmatprep.subr.bf16.mxu0 0
    %351 = vmatpush1.bf16.msra.mxu0 0
    %352 = vmatprep.subr.bf16.mxu0 0
    %353 = vmatpush1.bf16.msra.mxu0 0
    %354 = vmatprep.subr.bf16.mxu0 0
    %355 = vmatpush1.bf16.msra.mxu0 0
    %356 = vmatprep.subr.bf16.mxu0 0
    %357 = vmatpush1.bf16.msra.mxu0 0
    %358 = vmatprep.subr.bf16.mxu0 0
    %359 = vmatpush1.bf16.msra.mxu0 0
    %360 = vmatprep.mubr.bf16.mxu0 0
    %361 = vmatmul.mubr.bf16.gmra.mrb[0].mxu0 %v320
    %v362 = vpop.f32.mrb[0].mxu0
    %v363 = vadd.f32 %v305, %v362
    %v364 = vpop.f32.mrb[0].mxu0
    %v365 = vpop.f32.mrb[0].mxu0
    %v366 = vadd.f32 %v308, %v365
    %v367 = vpop.f32.mrb[0].mxu0
    %368 = vmatprep.mubr.bf16.mxu0 0
    %369 = vmatmul.mubr.bf16.gmra.mrb[0].mxu0 %v323
    %v370 = vpop.f32.mrb[0].mxu0
    %v371 = vadd.f32 %v313, %v370
    %v372 = vpop.f32.mrb[0].mxu0
    %v373 = vpop.f32.mrb[0].mxu0
    %v374 = vadd.f32 %v316, %v373
    %v375 = vpop.f32.mrb[0].mxu0
    %376 = vdwg.mxu0
    %v377 = vpack.c.bf16 %v247, %v246
    %v378 = vpack.c.bf16 %v249, %v248
    %v379 = vpack.c.bf16 %v252, %v252
    %v381 = vsel %vm259, %v377, 0
    %v384 = vsel %vm259, %v378, 0
    %v387 = vsel %vm266, %v379, 0
    %389 = vmatprep.subr.bf16.mxu0 0
    %390 = vmatpush1.bf16.msra.mxu0 %v387
    %391 = vmatprep.subr.bf16.mxu0 0
    %392 = vmatpush1.bf16.msra.mxu0 0
    %393 = vmatprep.subr.bf16.mxu0 0
    %394 = vmatpush1.bf16.msra.mxu0 0
    %395 = vmatprep.subr.bf16.mxu0 0
    %396 = vmatpush1.bf16.msra.mxu0 0
    %397 = vmatprep.subr.bf16.mxu0 0
    %398 = vmatpush1.bf16.msra.mxu0 0
    %399 = vmatprep.subr.bf16.mxu0 0
    %400 = vmatpush1.bf16.msra.mxu0 0
    %401 = vmatprep.subr.bf16.mxu0 0
    %402 = vmatpush1.bf16.msra.mxu0 0
    %403 = vmatprep.subr.bf16.mxu0 0
    %404 = vmatpush1.bf16.msra.mxu0 0
    %405 = vmatprep.subr.bf16.mxu0 0
    %406 = vmatpush1.bf16.msra.mxu0 0
    %407 = vmatprep.subr.bf16.mxu0 0
    %408 = vmatpush1.bf16.msra.mxu0 0
    %409 = vmatprep.subr.bf16.mxu0 0
    %410 = vmatpush1.bf16.msra.mxu0 0
    %411 = vmatprep.subr.bf16.mxu0 0
    %412 = vmatpush1.bf16.msra.mxu0 0
    %413 = vmatprep.subr.bf16.mxu0 0
    %414 = vmatpush1.bf16.msra.mxu0 0
    %415 = vmatprep.subr.bf16.mxu0 0
    %416 = vmatpush1.bf16.msra.mxu0 0
    %417 = vmatprep.subr.bf16.mxu0 0
    %418 = vmatpush1.bf16.msra.mxu0 0
    %419 = vmatprep.subr.bf16.mxu0 0
    %420 = vmatpush1.bf16.msra.mxu0 0
    %421 = vmatprep.mubr.bf16.mxu0 0
    %422 = vmatmul.mubr.bf16.gmra.mrb[0].mxu0 %v381
    %v423 = vpop.f32.mrb[0].mxu0
    %v424 = vadd.f32 0.0, %v423
    %v425 = vpop.f32.mrb[0].mxu0
    %v426 = vpop.f32.mrb[0].mxu0
    %v427 = vadd.f32 0.0, %v426
    %v428 = vpop.f32.mrb[0].mxu0
    %429 = vmatprep.mubr.bf16.mxu0 0
    %430 = vmatmul.mubr.bf16.gmra.mrb[0].mxu0 %v384
    %v431 = vpop.f32.mrb[0].mxu0
    %v432 = vadd.f32 0.0, %v431
    %v433 = vpop.f32.mrb[0].mxu0
    %v434 = vpop.f32.mrb[0].mxu0
    %v435 = vadd.f32 0.0, %v434
    %v436 = vpop.f32.mrb[0].mxu0
    %437 = vdwg.mxu0
    %v438 = vadd.f32 %v363, %v424
    %v439 = vadd.f32 %v366, %v427
    %v440 = vadd.f32 %v371, %v432
    %v441 = vadd.f32 %v374, %v435
    %v442 = vld [vmem:[#allocation20] sm:$0x1]
    %v443 = vlaneseq
    %v444 = vshrl.u32 %v443, 7
    %v445 = vsub.s32 0, %v444
    %v446 = vrot.slane %v442, %v445
    %v447 = vadd.f32 %v438, %v446
    %v448 = vadd.f32 %v439, %v446
    %v449 = vadd.f32 %v440, %v446
    %v450 = vadd.f32 %v441, %v446
    %v451 = vmax.f32 %v447, 0.0
    %v452 = vmax.f32 %v448, 0.0
    %v453 = vmax.f32 %v449, 0.0
    %v454 = vmax.f32 %v450, 0.0
    %v455 = vrot.slane %v451, 7
    %v456 = vrot.slane %v452, 7
    %v457 = vrot.slane %v453, 7
    %v458 = vrot.slane %v454, 7
    %v459 = vsel %vm212, %v457, %v458
    %v460 = vsel %vm212, %v456, %v457
    %v461 = vsel %vm212, %v455, %v456
    %v462 = vsel %vm212, %v458, %v455
    %v463 = vsel %vm221, 0.0, %v462
    %v464 = vsel %vm222, 0.0, %v461
    %v465 = vsel %vm223, 0.0, %v460
    %v466 = vsel %vm224, 0.0, %v459
    %v467 = vrot.slane %v451, 1
    %v468 = vrot.slane %v452, 1
    %v469 = vrot.slane %v453, 1
    %v470 = vrot.slane %v454, 1
    %v471 = vsel %vm233, %v469, %v470
    %v472 = vsel %vm233, %v468, %v469
    %v473 = vsel %vm233, %v467, %v468
    %v474 = vsel %vm233, %v470, %v467
    %v475 = vsel %vm242, 0.0, %v473
    %v476 = vsel %vm243, 0.0, %v472
    %v477 = vsel %vm244, 0.0, %v471
    %v478 = vsel %vm245, 0.0, %v474
    %v479 = vpack.c.bf16 %v464, %v463
    %v480 = vpack.c.bf16 %v466, %v465
    %v481 = vpack.c.bf16 %v452, %v451
    %v482 = vpack.c.bf16 %v454, %v453
    %v483 = vpack.c.bf16 %v476, %v475
    %v484 = vpack.c.bf16 %v478, %v477
    %v485 = vld [vmem:[#allocation8] sm:$0xf]
    %v486 = vld [vmem:[#allocation8 + $0x4] sm:$0xf]
    %v487 = vld [vmem:[#allocation8 + $0x8] sm:$0xf]
    %v488 = vld [vmem:[#allocation8 + $0xc] sm:$0xf]
    %v489 = vld [vmem:[#allocation8 + $0x10] sm:$0xf]
    %v490 = vld [vmem:[#allocation8 + $0x14] sm:$0xf]
    %v491 = vld [vmem:[#allocation8 + $0x18] sm:$0xf]
    %v492 = vld [vmem:[#allocation8 + $0x1c] sm:$0xf]
    %v493 = vld [vmem:[#allocation8 + $0x20] sm:$0xf]
    %v494 = vld [vmem:[#allocation8 + $0x24] sm:$0xf]
    %v495 = vld [vmem:[#allocation8 + $0x28] sm:$0xf]
    %v496 = vld [vmem:[#allocation8 + $0x2c] sm:$0xf]
    %v497 = vld [vmem:[#allocation8 + $0x30] sm:$0xf]
    %v498 = vld [vmem:[#allocation8 + $0x34] sm:$0xf]
    %v499 = vld [vmem:[#allocation8 + $0x38] sm:$0xf]
    %v500 = vld [vmem:[#allocation8 + $0x3c] sm:$0xf]
    %v501 = vld [vmem:[#allocation8 + $0x40] sm:$0xf]
    %v502 = vld [vmem:[#allocation8 + $0x44] sm:$0xf]
    %v503 = vld [vmem:[#allocation8 + $0x48] sm:$0xf]
    %v504 = vld [vmem:[#allocation8 + $0x4c] sm:$0xf]
    %v505 = vld [vmem:[#allocation8 + $0x50] sm:$0xf]
    %v506 = vld [vmem:[#allocation8 + $0x54] sm:$0xf]
    %v507 = vld [vmem:[#allocation8 + $0x58] sm:$0xf]
    %v508 = vld [vmem:[#allocation8 + $0x5c] sm:$0xf]
    %v509 = vld [vmem:[#allocation8 + $0x60] sm:$0xf]
    %v510 = vld [vmem:[#allocation8 + $0x64] sm:$0xf]
    %v511 = vld [vmem:[#allocation8 + $0x68] sm:$0xf]
    %v512 = vld [vmem:[#allocation8 + $0x6c] sm:$0xf]
    %v513 = vld [vmem:[#allocation8 + $0x70] sm:$0xf]
    %v514 = vld [vmem:[#allocation8 + $0x74] sm:$0xf]
    %v515 = vld [vmem:[#allocation8 + $0x78] sm:$0xf]
    %v516 = vld [vmem:[#allocation8 + $0x7c] sm:$0xf]
    %v517 = vld [vmem:[#allocation8 + $0x80] sm:$0xf]
    %v518 = vld [vmem:[#allocation8 + $0x84] sm:$0xf]
    %v519 = vld [vmem:[#allocation8 + $0x88] sm:$0xf]
    %v520 = vld [vmem:[#allocation8 + $0x8c] sm:$0xf]
    %v521 = vld [vmem:[#allocation8 + $0x90] sm:$0xf]
    %v522 = vld [vmem:[#allocation8 + $0x94] sm:$0xf]
    %v523 = vld [vmem:[#allocation8 + $0x98] sm:$0xf]
    %v524 = vld [vmem:[#allocation8 + $0x9c] sm:$0xf]
    %v525 = vld [vmem:[#allocation8 + $0xa0] sm:$0xf]
    %v526 = vld [vmem:[#allocation8 + $0xa4] sm:$0xf]
    %v527 = vld [vmem:[#allocation8 + $0xa8] sm:$0xf]
    %v528 = vld [vmem:[#allocation8 + $0xac] sm:$0xf]
    %v529 = vld [vmem:[#allocation8 + $0xb0] sm:$0xf]
    %v530 = vld [vmem:[#allocation8 + $0xb4] sm:$0xf]
    %v531 = vld [vmem:[#allocation8 + $0xb8] sm:$0xf]
    %v532 = vld [vmem:[#allocation8 + $0xbc] sm:$0xf]
    %v533 = vld [vmem:[#allocation20 + $0x1] sm:$0x1]
    %v534 = vlaneseq
    %v535 = vshrl.u32 %v534, 7
    %v536 = vsub.s32 0, %v535
    %v537 = vrot.slane %v533, %v536
    %v586 = vunpack.c.l.b16 %v485
    %v587 = vunpack.c.l.b16 %v486
    %v588 = vunpack.c.l.b16 %v487
    %v589 = vunpack.c.l.b16 %v488
    %v590 = vunpack.c.l.b16 %v489
    %v591 = vunpack.c.l.b16 %v490
    %v592 = vunpack.c.l.b16 %v491
    %v593 = vunpack.c.l.b16 %v492
    %v594 = vunpack.c.l.b16 %v493
    %v595 = vunpack.c.l.b16 %v494
    %v596 = vunpack.c.l.b16 %v495
    %v597 = vunpack.c.l.b16 %v496
    %v598 = vunpack.c.l.b16 %v497
    %v599 = vunpack.c.l.b16 %v498
    %v600 = vunpack.c.l.b16 %v499
    %v601 = vunpack.c.l.b16 %v500
    %v602 = vunpack.c.l.b16 %v501
    %v603 = vunpack.c.l.b16 %v502
    %v604 = vunpack.c.l.b16 %v503
    %v605 = vunpack.c.l.b16 %v504
    %v606 = vunpack.c.l.b16 %v505
    %v607 = vunpack.c.l.b16 %v506
    %v608 = vunpack.c.l.b16 %v507
    %v609 = vunpack.c.l.b16 %v508
    %v610 = vunpack.c.l.b16 %v509
    %v611 = vunpack.c.l.b16 %v510
    %v612 = vunpack.c.l.b16 %v511
    %v613 = vunpack.c.l.b16 %v512
    %v614 = vunpack.c.l.b16 %v513
    %v615 = vunpack.c.l.b16 %v514
    %v616 = vunpack.c.l.b16 %v515
    %v617 = vunpack.c.l.b16 %v516
    %v618 = vunpack.c.l.b16 %v517
    %v619 = vunpack.c.l.b16 %v518
    %v620 = vunpack.c.l.b16 %v519
    %v621 = vunpack.c.l.b16 %v520
    %v622 = vunpack.c.l.b16 %v521
    %v623 = vunpack.c.l.b16 %v522
    %v624 = vunpack.c.l.b16 %v523
    %v625 = vunpack.c.l.b16 %v524
    %v626 = vunpack.c.l.b16 %v525
    %v627 = vunpack.c.l.b16 %v526
    %v628 = vunpack.c.l.b16 %v527
    %v629 = vunpack.c.l.b16 %v528
    %v630 = vunpack.c.l.b16 %v529
    %v631 = vunpack.c.l.b16 %v530
    %v632 = vunpack.c.l.b16 %v531
    %v633 = vunpack.c.l.b16 %v532
    %v634 = vpack.c.b16 %v587, %v586
    %v635 = vpack.c.b16 %v589, %v588
    %v636 = vpack.c.b16 %v591, %v590
    %v637 = vpack.c.b16 %v593, %v592
    %v638 = vpack.c.b16 %v595, %v594
    %v639 = vpack.c.b16 %v597, %v596
    %v640 = vpack.c.b16 %v599, %v598
    %v641 = vpack.c.b16 %v601, %v600
    %v642 = vpack.c.b16 %v603, %v602
    %v643 = vpack.c.b16 %v605, %v604
    %v644 = vpack.c.b16 %v607, %v606
    %v645 = vpack.c.b16 %v609, %v608
    %v646 = vpack.c.b16 %v611, %v610
    %v647 = vpack.c.b16 %v613, %v612
    %v648 = vpack.c.b16 %v615, %v614
    %v649 = vpack.c.b16 %v617, %v616
    %v650 = vpack.c.b16 %v619, %v618
    %v651 = vpack.c.b16 %v621, %v620
    %v652 = vpack.c.b16 %v623, %v622
    %v653 = vpack.c.b16 %v625, %v624
    %v654 = vpack.c.b16 %v627, %v626
    %v655 = vpack.c.b16 %v629, %v628
    %v656 = vpack.c.b16 %v631, %v630
    %v657 = vpack.c.b16 %v633, %v632
    %682 = vmatprep.subr.bf16.mxu0 0
    %683 = vmatpush1.bf16.msra.mxu0 %v634
    %684 = vmatprep.subr.bf16.mxu0 0
    %685 = vmatpush1.bf16.msra.mxu0 %v635
    %686 = vmatprep.subr.bf16.mxu0 0
    %687 = vmatpush1.bf16.msra.mxu0 %v636
    %688 = vmatprep.subr.bf16.mxu0 0
    %689 = vmatpush1.bf16.msra.mxu0 %v637
    %690 = vmatprep.subr.bf16.mxu0 0
    %691 = vmatpush1.bf16.msra.mxu0 %v638
    %692 = vmatprep.subr.bf16.mxu0 0
    %693 = vmatpush1.bf16.msra.mxu0 %v639
    %694 = vmatprep.subr.bf16.mxu0 0
    %695 = vmatpush1.bf16.msra.mxu0 %v640
    %696 = vmatprep.subr.bf16.mxu0 0
    %697 = vmatpush1.bf16.msra.mxu0 %v641
    %698 = vmatprep.subr.bf16.mxu0 0
    %699 = vmatpush1.bf16.msra.mxu0 %v642
    %700 = vmatprep.subr.bf16.mxu0 0
    %701 = vmatpush1.bf16.msra.mxu0 %v643
    %702 = vmatprep.subr.bf16.mxu0 0
    %703 = vmatpush1.bf16.msra.mxu0 %v644
    %704 = vmatprep.subr.bf16.mxu0 0
    %705 = vmatpush1.bf16.msra.mxu0 %v645
    %706 = vmatprep.subr.bf16.mxu0 0
    %707 = vmatpush1.bf16.msra.mxu0 %v646
    %708 = vmatprep.subr.bf16.mxu0 0
    %709 = vmatpush1.bf16.msra.mxu0 %v647
    %710 = vmatprep.subr.bf16.mxu0 0
    %711 = vmatpush1.bf16.msra.mxu0 %v648
    %712 = vmatprep.subr.bf16.mxu0 0
    %713 = vmatpush1.bf16.msra.mxu0 %v649
    %714 = vmatprep.mubr.bf16.mxu0 %v481
    %715 = vmatmul.mubr.bf16.gmra.mrb[0].mxu0 %v479
    %v716 = vpop.f32.mrb[0].mxu0
    %v717 = vadd.f32 %v537, %v716
    %v718 = vpop.f32.mrb[0].mxu0
    %v719 = vpop.f32.mrb[0].mxu0
    %v720 = vadd.f32 %v537, %v719
    %v721 = vpop.f32.mrb[0].mxu0
    %722 = vmatprep.mubr.bf16.mxu0 %v482
    %723 = vmatmul.mubr.bf16.gmra.mrb[0].mxu0 %v480
    %v724 = vpop.f32.mrb[0].mxu0
    %v725 = vadd.f32 %v537, %v724
    %v726 = vpop.f32.mrb[0].mxu0
    %v727 = vpop.f32.mrb[0].mxu0
    %v728 = vadd.f32 %v537, %v727
    %v729 = vpop.f32.mrb[0].mxu0
    %730 = vdwg.mxu0
    %731 = vmatprep.subr.bf16.mxu0 0
    %732 = vmatpush1.bf16.msra.mxu0 %v650
    %733 = vmatprep.subr.bf16.mxu0 0
    %734 = vmatpush1.bf16.msra.mxu0 %v651
    %735 = vmatprep.subr.bf16.mxu0 0
    %736 = vmatpush1.bf16.msra.mxu0 %v652
    %737 = vmatprep.subr.bf16.mxu0 0
    %738 = vmatpush1.bf16.msra.mxu0 %v653
    %739 = vmatprep.subr.bf16.mxu0 0
    %740 = vmatpush1.bf16.msra.mxu0 %v654
    %741 = vmatprep.subr.bf16.mxu0 0
    %742 = vmatpush1.bf16.msra.mxu0 %v655
    %743 = vmatprep.subr.bf16.mxu0 0
    %744 = vmatpush1.bf16.msra.mxu0 %v656
    %745 = vmatprep.subr.bf16.mxu0 0
    %746 = vmatpush1.bf16.msra.mxu0 %v657
    %747 = vmatprep.subr.bf16.mxu0 0
    %748 = vmatpush1.bf16.msra.mxu0 0
    %749 = vmatprep.subr.bf16.mxu0 0
    %750 = vmatpush1.bf16.msra.mxu0 0
    %751 = vmatprep.subr.bf16.mxu0 0
    %752 = vmatpush1.bf16.msra.mxu0 0
    %753 = vmatprep.subr.bf16.mxu0 0
    %754 = vmatpush1.bf16.msra.mxu0 0
    %755 = vmatprep.subr.bf16.mxu0 0
    %756 = vmatpush1.bf16.msra.mxu0 0
    %757 = vmatprep.subr.bf16.mxu0 0
    %758 = vmatpush1.bf16.msra.mxu0 0
    %759 = vmatprep.subr.bf16.mxu0 0
    %760 = vmatpush1.bf16.msra.mxu0 0
    %761 = vmatprep.subr.bf16.mxu0 0
    %762 = vmatpush1.bf16.msra.mxu0 0
    %763 = vmatprep.mubr.bf16.mxu0 0
    %764 = vmatmul.mubr.bf16.gmra.mrb[0].mxu0 %v483
    %v765 = vpop.f32.mrb[0].mxu0
    %v766 = vadd.f32 %v717, %v765
    %v767 = vpop.f32.mrb[0].mxu0
    %v768 = vpop.f32.mrb[0].mxu0
    %v769 = vadd.f32 %v720, %v768
    %v770 = vpop.f32.mrb[0].mxu0
    %771 = vmatprep.mubr.bf16.mxu0 0
    %772 = vmatmul.mubr.bf16.gmra.mrb[0].mxu0 %v484
    %v773 = vpop.f32.mrb[0].mxu0
    %v774 = vadd.f32 %v725, %v773
    %v775 = vpop.f32.mrb[0].mxu0
    %v776 = vpop.f32.mrb[0].mxu0
    %v777 = vadd.f32 %v728, %v776
    %v778 = vpop.f32.mrb[0].mxu0
    %779 = vdwg.mxu0
    %v780 = vld [vmem:[#allocation9] sm:$0xf]
    %v781 = vld [vmem:[#allocation20 + $0x2] sm:$0x1]
    %v782 = vlaneseq
    %v783 = vshrl.u32 %v782, 7
    %v784 = vsub.s32 0, %v783
    %v785 = vrot.slane %v781, %v784
    %v787 = vsel %vm266, %v780, 0
    %789 = vmatprep.subr.bf16.mxu0 0
    %790 = vmatpush1.bf16.msra.mxu0 %v787
    %791 = vmatprep.subr.bf16.mxu0 0
    %792 = vmatpush1.bf16.msra.mxu0 0
    %793 = vmatprep.subr.bf16.mxu0 0
    %794 = vmatpush1.bf16.msra.mxu0 0
    %795 = vmatprep.subr.bf16.mxu0 0
    %796 = vmatpush1.bf16.msra.mxu0 0
    %797 = vmatprep.subr.bf16.mxu0 0
    %798 = vmatpush1.bf16.msra.mxu0 0
    %799 = vmatprep.subr.bf16.mxu0 0
    %800 = vmatpush1.bf16.msra.mxu0 0
    %801 = vmatprep.subr.bf16.mxu0 0
    %802 = vmatpush1.bf16.msra.mxu0 0
    %803 = vmatprep.subr.bf16.mxu0 0
    %804 = vmatpush1.bf16.msra.mxu0 0
    %805 = vmatprep.subr.bf16.mxu0 0
    %806 = vmatpush1.bf16.msra.mxu0 0
    %807 = vmatprep.subr.bf16.mxu0 0
    %808 = vmatpush1.bf16.msra.mxu0 0
    %809 = vmatprep.subr.bf16.mxu0 0
    %810 = vmatpush1.bf16.msra.mxu0 0
    %811 = vmatprep.subr.bf16.mxu0 0
    %812 = vmatpush1.bf16.msra.mxu0 0
    %813 = vmatprep.subr.bf16.mxu0 0
    %814 = vmatpush1.bf16.msra.mxu0 0
    %815 = vmatprep.subr.bf16.mxu0 0
    %816 = vmatpush1.bf16.msra.mxu0 0
    %817 = vmatprep.subr.bf16.mxu0 0
    %818 = vmatpush1.bf16.msra.mxu0 0
    %819 = vmatprep.subr.bf16.mxu0 0
    %820 = vmatpush1.bf16.msra.mxu0 0
    %821 = vmatprep.mubr.bf16.mxu0 0
    %822 = vmatmul.mubr.bf16.gmra.mrb[0].mxu0 %v261
    %v823 = vpop.f32.mrb[0].mxu0
    %v824 = vadd.f32 %v785, %v823
    %v825 = vpop.f32.mrb[0].mxu0
    %v826 = vpop.f32.mrb[0].mxu0
    %v827 = vadd.f32 %v785, %v826
    %v828 = vpop.f32.mrb[0].mxu0
    %829 = vmatprep.mubr.bf16.mxu0 0
    %830 = vmatmul.mubr.bf16.gmra.mrb[0].mxu0 %v264
    %v831 = vpop.f32.mrb[0].mxu0
    %v832 = vadd.f32 %v785, %v831
    %v833 = vpop.f32.mrb[0].mxu0
    %v834 = vpop.f32.mrb[0].mxu0
    %v835 = vadd.f32 %v785, %v834
    %v836 = vpop.f32.mrb[0].mxu0
    %837 = vdwg.mxu0
    %v838 = vadd.f32 %v766, %v824
    %v839 = vadd.f32 %v769, %v827
    %v840 = vadd.f32 %v774, %v832
    %v841 = vadd.f32 %v777, %v835
    %v842 = vmax.f32 %v838, 0.0
    %v843 = vmax.f32 %v839, 0.0
    %v844 = vmax.f32 %v840, 0.0
    %v845 = vmax.f32 %v841, 0.0
    %v846 = vrot.slane %v842, 7
    %v847 = vrot.slane %v843, 7
    %v848 = vrot.slane %v844, 7
    %v849 = vrot.slane %v845, 7
    %v850 = vsel %vm212, %v848, %v849
    %v851 = vsel %vm212, %v847, %v848
    %v852 = vsel %vm212, %v846, %v847
    %v853 = vsel %vm212, %v849, %v846
    %v854 = vsel %vm221, 0.0, %v853
    %v855 = vsel %vm222, 0.0, %v852
    %v856 = vsel %vm223, 0.0, %v851
    %v857 = vsel %vm224, 0.0, %v850
    %v858 = vrot.slane %v842, 1
    %v859 = vrot.slane %v843, 1
    %v860 = vrot.slane %v844, 1
    %v861 = vrot.slane %v845, 1
    %v862 = vsel %vm233, %v860, %v861
    %v863 = vsel %vm233, %v859, %v860
    %v864 = vsel %vm233, %v858, %v859
    %v865 = vsel %vm233, %v861, %v858
    %v866 = vsel %vm242, 0.0, %v864
    %v867 = vsel %vm243, 0.0, %v863
    %v868 = vsel %vm244, 0.0, %v862
    %v869 = vsel %vm245, 0.0, %v865
    %870 = vst [vmem:[#allocation2] sm:$0xff] %v854
    %871 = vst [vmem:[#allocation2 + $0x8] sm:$0xff] %v855
    %872 = vst [vmem:[#allocation2 + $0x10] sm:$0xff] %v856
    %873 = vst [vmem:[#allocation2 + $0x18] sm:$0xff] %v857
    %v874 = vld [vmem:[#allocation2] ss:$2 sm:$0xff]
    %s875 = scalar_lea.vmem [#allocation2], 16
    %v876 = vld [vmem:[%s875] ss:$2 sm:$0xff]
    %877 = vst [vmem:[#allocation2] sm:$0xff] %v842
    %878 = vst [vmem:[#allocation2 + $0x8] sm:$0xff] %v843
    %879 = vst [vmem:[#allocation2 + $0x10] sm:$0xff] %v844
    %880 = vst [vmem:[#allocation2 + $0x18] sm:$0xff] %v845
    %v881 = vld [vmem:[#allocation2] ss:$2 sm:$0xff]
    %v882 = vld [vmem:[%s875] ss:$2 sm:$0xff]
    %883 = vst [vmem:[#allocation2] sm:$0xff] %v866
    %884 = vst [vmem:[#allocation2 + $0x8] sm:$0xff] %v867
    %885 = vst [vmem:[#allocation2 + $0x10] sm:$0xff] %v868
    %886 = vst [vmem:[#allocation2 + $0x18] sm:$0xff] %v869
    %v887 = vld [vmem:[#allocation2] ss:$2 sm:$0xff]
    %v888 = vld [vmem:[%s875] ss:$2 sm:$0xff]
    %v889 = vpack.c.bf16 %v876, %v874
    %v890 = vpack.c.bf16 %v882, %v881
    %v891 = vpack.c.bf16 %v888, %v887
    %v892 = vld [vmem:[#allocation11] sm:$0xf]
    %v893 = vld [vmem:[#allocation11 + $0x4] sm:$0xf]
    %v894 = vld [vmem:[#allocation11 + $0x8] sm:$0xf]
    %v895 = vld [vmem:[#allocation11 + $0xc] sm:$0xf]
    %v896 = vld [vmem:[#allocation11 + $0x10] sm:$0xf]
    %v897 = vld [vmem:[#allocation11 + $0x14] sm:$0xf]
    %v898 = vld [vmem:[#allocation11 + $0x18] sm:$0xf]
    %v899 = vld [vmem:[#allocation11 + $0x1c] sm:$0xf]
    %v900 = vld [vmem:[#allocation11 + $0x20] sm:$0xf]
    %v901 = vld [vmem:[#allocation11 + $0x24] sm:$0xf]
    %v902 = vld [vmem:[#allocation11 + $0x28] sm:$0xf]
    %v903 = vld [vmem:[#allocation11 + $0x2c] sm:$0xf]
    %v904 = vld [vmem:[#allocation11 + $0x30] sm:$0xf]
    %v905 = vld [vmem:[#allocation11 + $0x34] sm:$0xf]
    %v906 = vld [vmem:[#allocation11 + $0x38] sm:$0xf]
    %v907 = vld [vmem:[#allocation11 + $0x3c] sm:$0xf]
    %v908 = vld [vmem:[#allocation11 + $0x40] sm:$0xf]
    %v909 = vld [vmem:[#allocation11 + $0x44] sm:$0xf]
    %v910 = vld [vmem:[#allocation11 + $0x48] sm:$0xf]
    %v911 = vld [vmem:[#allocation11 + $0x4c] sm:$0xf]
    %v912 = vld [vmem:[#allocation11 + $0x50] sm:$0xf]
    %v913 = vld [vmem:[#allocation11 + $0x54] sm:$0xf]
    %v914 = vld [vmem:[#allocation11 + $0x58] sm:$0xf]
    %v915 = vld [vmem:[#allocation11 + $0x5c] sm:$0xf]
    %v916 = vld [vmem:[#allocation11 + $0x60] sm:$0xf]
    %v917 = vld [vmem:[#allocation11 + $0x64] sm:$0xf]
    %v918 = vld [vmem:[#allocation11 + $0x68] sm:$0xf]
    %v919 = vld [vmem:[#allocation11 + $0x6c] sm:$0xf]
    %v920 = vld [vmem:[#allocation11 + $0x70] sm:$0xf]
    %v921 = vld [vmem:[#allocation11 + $0x74] sm:$0xf]
    %v922 = vld [vmem:[#allocation11 + $0x78] sm:$0xf]
    %v923 = vld [vmem:[#allocation11 + $0x7c] sm:$0xf]
    %v924 = vld [vmem:[#allocation11 + $0x80] sm:$0xf]
    %v925 = vld [vmem:[#allocation11 + $0x84] sm:$0xf]
    %v926 = vld [vmem:[#allocation11 + $0x88] sm:$0xf]
    %v927 = vld [vmem:[#allocation11 + $0x8c] sm:$0xf]
    %v928 = vld [vmem:[#allocation11 + $0x90] sm:$0xf]
    %v929 = vld [vmem:[#allocation11 + $0x94] sm:$0xf]
    %v930 = vld [vmem:[#allocation11 + $0x98] sm:$0xf]
    %v931 = vld [vmem:[#allocation11 + $0x9c] sm:$0xf]
    %v932 = vld [vmem:[#allocation11 + $0xa0] sm:$0xf]
    %v933 = vld [vmem:[#allocation11 + $0xa4] sm:$0xf]
    %v934 = vld [vmem:[#allocation11 + $0xa8] sm:$0xf]
    %v935 = vld [vmem:[#allocation11 + $0xac] sm:$0xf]
    %v936 = vld [vmem:[#allocation11 + $0xb0] sm:$0xf]
    %v937 = vld [vmem:[#allocation11 + $0xb4] sm:$0xf]
    %v938 = vld [vmem:[#allocation11 + $0xb8] sm:$0xf]
    %v939 = vld [vmem:[#allocation11 + $0xbc] sm:$0xf]
    %v940 = vld [vmem:[#allocation20 + $0x3] sm:$0x1]
    %v941 = vlaneseq
    %v942 = vshrl.u32 %v941, 7
    %v943 = vsub.s32 0, %v942
    %v944 = vrot.slane %v940, %v943
    %v993 = vunpack.c.l.b16 %v892
    %v994 = vunpack.c.l.b16 %v893
    %v995 = vunpack.c.l.b16 %v894
    %v996 = vunpack.c.l.b16 %v895
    %v997 = vunpack.c.l.b16 %v896
    %v998 = vunpack.c.l.b16 %v897
    %v999 = vunpack.c.l.b16 %v898
    %v1000 = vunpack.c.l.b16 %v899
    %v1001 = vunpack.c.l.b16 %v900
    %v1002 = vunpack.c.l.b16 %v901
    %v1003 = vunpack.c.l.b16 %v902
    %v1004 = vunpack.c.l.b16 %v903
    %v1005 = vunpack.c.l.b16 %v904
    %v1006 = vunpack.c.l.b16 %v905
    %v1007 = vunpack.c.l.b16 %v906
    %v1008 = vunpack.c.l.b16 %v907
    %v1009 = vunpack.c.l.b16 %v908
    %v1010 = vunpack.c.l.b16 %v909
    %v1011 = vunpack.c.l.b16 %v910
    %v1012 = vunpack.c.l.b16 %v911
    %v1013 = vunpack.c.l.b16 %v912
    %v1014 = vunpack.c.l.b16 %v913
    %v1015 = vunpack.c.l.b16 %v914
    %v1016 = vunpack.c.l.b16 %v915
    %v1017 = vunpack.c.l.b16 %v916
    %v1018 = vunpack.c.l.b16 %v917
    %v1019 = vunpack.c.l.b16 %v918
    %v1020 = vunpack.c.l.b16 %v919
    %v1021 = vunpack.c.l.b16 %v920
    %v1022 = vunpack.c.l.b16 %v921
    %v1023 = vunpack.c.l.b16 %v922
    %v1024 = vunpack.c.l.b16 %v923
    %v1025 = vunpack.c.l.b16 %v924
    %v1026 = vunpack.c.l.b16 %v925
    %v1027 = vunpack.c.l.b16 %v926
    %v1028 = vunpack.c.l.b16 %v927
    %v1029 = vunpack.c.l.b16 %v928
    %v1030 = vunpack.c.l.b16 %v929
    %v1031 = vunpack.c.l.b16 %v930
    %v1032 = vunpack.c.l.b16 %v931
    %v1033 = vunpack.c.l.b16 %v932
    %v1034 = vunpack.c.l.b16 %v933
    %v1035 = vunpack.c.l.b16 %v934
    %v1036 = vunpack.c.l.b16 %v935
    %v1037 = vunpack.c.l.b16 %v936
    %v1038 = vunpack.c.l.b16 %v937
    %v1039 = vunpack.c.l.b16 %v938
    %v1040 = vunpack.c.l.b16 %v939
    %v1041 = vpack.c.b16 %v994, %v993
    %v1042 = vpack.c.b16 %v996, %v995
    %v1043 = vpack.c.b16 %v998, %v997
    %v1044 = vpack.c.b16 %v1000, %v999
    %v1045 = vpack.c.b16 %v1002, %v1001
    %v1046 = vpack.c.b16 %v1004, %v1003
    %v1047 = vpack.c.b16 %v1006, %v1005
    %v1048 = vpack.c.b16 %v1008, %v1007
    %v1049 = vpack.c.b16 %v1010, %v1009
    %v1050 = vpack.c.b16 %v1012, %v1011
    %v1051 = vpack.c.b16 %v1014, %v1013
    %v1052 = vpack.c.b16 %v1016, %v1015
    %v1053 = vpack.c.b16 %v1018, %v1017
    %v1054 = vpack.c.b16 %v1020, %v1019
    %v1055 = vpack.c.b16 %v1022, %v1021
    %v1056 = vpack.c.b16 %v1024, %v1023
    %v1057 = vpack.c.b16 %v1026, %v1025
    %v1058 = vpack.c.b16 %v1028, %v1027
    %v1059 = vpack.c.b16 %v1030, %v1029
    %v1060 = vpack.c.b16 %v1032, %v1031
    %v1061 = vpack.c.b16 %v1034, %v1033
    %v1062 = vpack.c.b16 %v1036, %v1035
    %v1063 = vpack.c.b16 %v1038, %v1037
    %v1064 = vpack.c.b16 %v1040, %v1039
    %1089 = vmatprep.subr.bf16.mxu0 0
    %1090 = vmatpush1.bf16.msra.mxu0 %v1041
    %1091 = vmatprep.subr.bf16.mxu0 0
    %1092 = vmatpush1.bf16.msra.mxu0 %v1042
    %1093 = vmatprep.subr.bf16.mxu0 0
    %1094 = vmatpush1.bf16.msra.mxu0 %v1043
    %1095 = vmatprep.subr.bf16.mxu0 0
    %1096 = vmatpush1.bf16.msra.mxu0 %v1044
    %1097 = vmatprep.subr.bf16.mxu0 0
    %1098 = vmatpush1.bf16.msra.mxu0 %v1045
    %1099 = vmatprep.subr.bf16.mxu0 0
    %1100 = vmatpush1.bf16.msra.mxu0 %v1046
    %1101 = vmatprep.subr.bf16.mxu0 0
    %1102 = vmatpush1.bf16.msra.mxu0 %v1047
    %1103 = vmatprep.subr.bf16.mxu0 0
    %1104 = vmatpush1.bf16.msra.mxu0 %v1048
    %1105 = vmatprep.subr.bf16.mxu0 0
    %1106 = vmatpush1.bf16.msra.mxu0 %v1049
    %1107 = vmatprep.subr.bf16.mxu0 0
    %1108 = vmatpush1.bf16.msra.mxu0 %v1050
    %1109 = vmatprep.subr.bf16.mxu0 0
    %1110 = vmatpush1.bf16.msra.mxu0 %v1051
    %1111 = vmatprep.subr.bf16.mxu0 0
    %1112 = vmatpush1.bf16.msra.mxu0 %v1052
    %1113 = vmatprep.subr.bf16.mxu0 0
    %1114 = vmatpush1.bf16.msra.mxu0 %v1053
    %1115 = vmatprep.subr.bf16.mxu0 0
    %1116 = vmatpush1.bf16.msra.mxu0 %v1054
    %1117 = vmatprep.subr.bf16.mxu0 0
    %1118 = vmatpush1.bf16.msra.mxu0 %v1055
    %1119 = vmatprep.subr.bf16.mxu0 0
    %1120 = vmatpush1.bf16.msra.mxu0 %v1056
    %1121 = vmatprep.mubr.bf16.mxu0 %v890
    %1122 = vmatmul.mubr.bf16.gmra.mrb[0].mxu0 %v889
    %v1123 = vpop.f32.mrb[0].mxu0
    %v1124 = vadd.f32 %v944, %v1123
    %v1125 = vpop.f32.mrb[0].mxu0
    %v1126 = vpop.f32.mrb[0].mxu0
    %v1127 = vadd.f32 %v944, %v1126
    %v1128 = vpop.f32.mrb[0].mxu0
    %1129 = vdwg.mxu0
    %1130 = vmatprep.subr.bf16.mxu0 0
    %1131 = vmatpush1.bf16.msra.mxu0 %v1057
    %1132 = vmatprep.subr.bf16.mxu0 0
    %1133 = vmatpush1.bf16.msra.mxu0 %v1058
    %1134 = vmatprep.subr.bf16.mxu0 0
    %1135 = vmatpush1.bf16.msra.mxu0 %v1059
    %1136 = vmatprep.subr.bf16.mxu0 0
    %1137 = vmatpush1.bf16.msra.mxu0 %v1060
    %1138 = vmatprep.subr.bf16.mxu0 0
    %1139 = vmatpush1.bf16.msra.mxu0 %v1061
    %1140 = vmatprep.subr.bf16.mxu0 0
    %1141 = vmatpush1.bf16.msra.mxu0 %v1062
    %1142 = vmatprep.subr.bf16.mxu0 0
    %1143 = vmatpush1.bf16.msra.mxu0 %v1063
    %1144 = vmatprep.subr.bf16.mxu0 0
    %1145 = vmatpush1.bf16.msra.mxu0 %v1064
    %1146 = vmatprep.subr.bf16.mxu0 0
    %1147 = vmatpush1.bf16.msra.mxu0 0
    %1148 = vmatprep.subr.bf16.mxu0 0
    %1149 = vmatpush1.bf16.msra.mxu0 0
    %1150 = vmatprep.subr.bf16.mxu0 0
    %1151 = vmatpush1.bf16.msra.mxu0 0
    %1152 = vmatprep.subr.bf16.mxu0 0
    %1153 = vmatpush1.bf16.msra.mxu0 0
    %1154 = vmatprep.subr.bf16.mxu0 0
    %1155 = vmatpush1.bf16.msra.mxu0 0
    %1156 = vmatprep.subr.bf16.mxu0 0
    %1157 = vmatpush1.bf16.msra.mxu0 0
    %1158 = vmatprep.subr.bf16.mxu0 0
    %1159 = vmatpush1.bf16.msra.mxu0 0
    %1160 = vmatprep.subr.bf16.mxu0 0
    %1161 = vmatpush1.bf16.msra.mxu0 0
    %1162 = vmatprep.mubr.bf16.mxu0 0
    %1163 = vmatmul.mubr.bf16.gmra.mrb[0].mxu0 %v891
    %v1164 = vpop.f32.mrb[0].mxu0
    %v1165 = vadd.f32 %v1124, %v1164
    %v1166 = vpop.f32.mrb[0].mxu0
    %v1167 = vpop.f32.mrb[0].mxu0
    %v1168 = vadd.f32 %v1127, %v1167
    %v1169 = vpop.f32.mrb[0].mxu0
    %1170 = vdwg.mxu0
    %v1171 = vmax.f32 %v1165, 0.0
    %v1172 = vmax.f32 %v1168, 0.0
    %v1173 = vand.u32 %v192, 7
    %v1174 = vand.u32 %v193, 7
    %vm1175 = vcmp.eq.s32.totalorder %v1173, 0
    %vm1176 = vcmp.eq.s32.totalorder %v1174, 0
    %vm1177 = vcmp.eq.s32.totalorder %v1173, 7
    %vm1178 = vcmp.eq.s32.totalorder %v1174, 7
    %v1179 = vrot.slane %v1171, 7
    %v1180 = vrot.slane %v1172, 7
    %v1181 = vsel %vm212, %v1179, %v1180
    %v1182 = vsel %vm212, %v1180, %v1179
    %v1183 = vsel %vm1175, 1, 0
    %v1184 = vsel %vm1176, 1, 0
    %vm1185 = vcmp.eq.s32.totalorder %v1183, 1
    %vm1186 = vcmp.eq.s32.totalorder %v1184, 1
    %v1187 = vsel %vm1185, 0.0, %v1182
    %v1188 = vsel %vm1186, 0.0, %v1181
    %v1189 = vrot.slane %v1171, 1
    %v1190 = vrot.slane %v1172, 1
    %v1191 = vsel %vm233, %v1189, %v1190
    %v1192 = vsel %vm233, %v1190, %v1189
    %v1193 = vsel %vm1177, 1, 0
    %v1194 = vsel %vm1178, 1, 0
    %vm1195 = vcmp.eq.s32.totalorder %v1193, 1
    %vm1196 = vcmp.eq.s32.totalorder %v1194, 1
    %v1197 = vsel %vm1195, 0.0, %v1191
    %v1198 = vsel %vm1196, 0.0, %v1192
    %v1199 = vpack.c.bf16 %v1188, %v1187
    %v1200 = vpack.c.bf16 %v1172, %v1171
    %v1201 = vpack.c.bf16 %v1198, %v1197
    %v1202 = vld [vmem:[#allocation12] sm:$0xf]
    %v1203 = vld [vmem:[#allocation12 + $0x4] sm:$0xf]
    %v1204 = vld [vmem:[#allocation12 + $0x8] sm:$0xf]
    %v1205 = vld [vmem:[#allocation12 + $0xc] sm:$0xf]
    %v1206 = vld [vmem:[#allocation12 + $0x10] sm:$0xf]
    %v1207 = vld [vmem:[#allocation12 + $0x14] sm:$0xf]
    %v1208 = vld [vmem:[#allocation12 + $0x18] sm:$0xf]
    %v1209 = vld [vmem:[#allocation12 + $0x1c] sm:$0xf]
    %v1210 = vld [vmem:[#allocation12 + $0x20] sm:$0xf]
    %v1211 = vld [vmem:[#allocation12 + $0x24] sm:$0xf]
    %v1212 = vld [vmem:[#allocation12 + $0x28] sm:$0xf]
    %v1213 = vld [vmem:[#allocation12 + $0x2c] sm:$0xf]
    %v1214 = vld [vmem:[#allocation12 + $0x30] sm:$0xf]
    %v1215 = vld [vmem:[#allocation12 + $0x34] sm:$0xf]
    %v1216 = vld [vmem:[#allocation12 + $0x38] sm:$0xf]
    %v1217 = vld [vmem:[#allocation12 + $0x3c] sm:$0xf]
    %v1218 = vld [vmem:[#allocation12 + $0x40] sm:$0xf]
    %v1219 = vld [vmem:[#allocation12 + $0x44] sm:$0xf]
    %v1220 = vld [vmem:[#allocation12 + $0x48] sm:$0xf]
    %v1221 = vld [vmem:[#allocation12 + $0x4c] sm:$0xf]
    %v1222 = vld [vmem:[#allocation12 + $0x50] sm:$0xf]
    %v1223 = vld [vmem:[#allocation12 + $0x54] sm:$0xf]
    %v1224 = vld [vmem:[#allocation12 + $0x58] sm:$0xf]
    %v1225 = vld [vmem:[#allocation12 + $0x5c] sm:$0xf]
    %v1226 = vld [vmem:[#allocation12 + $0x60] sm:$0xf]
    %v1227 = vld [vmem:[#allocation12 + $0x64] sm:$0xf]
    %v1228 = vld [vmem:[#allocation12 + $0x68] sm:$0xf]
    %v1229 = vld [vmem:[#allocation12 + $0x6c] sm:$0xf]
    %v1230 = vld [vmem:[#allocation12 + $0x70] sm:$0xf]
    %v1231 = vld [vmem:[#allocation12 + $0x74] sm:$0xf]
    %v1232 = vld [vmem:[#allocation12 + $0x78] sm:$0xf]
    %v1233 = vld [vmem:[#allocation12 + $0x7c] sm:$0xf]
    %v1234 = vld [vmem:[#allocation12 + $0x80] sm:$0xf]
    %v1235 = vld [vmem:[#allocation12 + $0x84] sm:$0xf]
    %v1236 = vld [vmem:[#allocation12 + $0x88] sm:$0xf]
    %v1237 = vld [vmem:[#allocation12 + $0x8c] sm:$0xf]
    %v1238 = vld [vmem:[#allocation12 + $0x90] sm:$0xf]
    %v1239 = vld [vmem:[#allocation12 + $0x94] sm:$0xf]
    %v1240 = vld [vmem:[#allocation12 + $0x98] sm:$0xf]
    %v1241 = vld [vmem:[#allocation12 + $0x9c] sm:$0xf]
    %v1242 = vld [vmem:[#allocation12 + $0xa0] sm:$0xf]
    %v1243 = vld [vmem:[#allocation12 + $0xa4] sm:$0xf]
    %v1244 = vld [vmem:[#allocation12 + $0xa8] sm:$0xf]
    %v1245 = vld [vmem:[#allocation12 + $0xac] sm:$0xf]
    %v1246 = vld [vmem:[#allocation12 + $0xb0] sm:$0xf]
    %v1247 = vld [vmem:[#allocation12 + $0xb4] sm:$0xf]
    %v1248 = vld [vmem:[#allocation12 + $0xb8] sm:$0xf]
    %v1249 = vld [vmem:[#allocation12 + $0xbc] sm:$0xf]
    %v1250 = vld [vmem:[#allocation20 + $0x4] sm:$0x1]
    %v1251 = vlaneseq
    %v1252 = vshrl.u32 %v1251, 7
    %v1253 = vsub.s32 0, %v1252
    %v1254 = vrot.slane %v1250, %v1253
    %v1303 = vunpack.c.l.b16 %v1202
    %v1304 = vunpack.c.l.b16 %v1203
    %v1305 = vunpack.c.l.b16 %v1204
    %v1306 = vunpack.c.l.b16 %v1205
    %v1307 = vunpack.c.l.b16 %v1206
    %v1308 = vunpack.c.l.b16 %v1207
    %v1309 = vunpack.c.l.b16 %v1208
    %v1310 = vunpack.c.l.b16 %v1209
    %v1311 = vunpack.c.l.b16 %v1210
    %v1312 = vunpack.c.l.b16 %v1211
    %v1313 = vunpack.c.l.b16 %v1212
    %v1314 = vunpack.c.l.b16 %v1213
    %v1315 = vunpack.c.l.b16 %v1214
    %v1316 = vunpack.c.l.b16 %v1215
    %v1317 = vunpack.c.l.b16 %v1216
    %v1318 = vunpack.c.l.b16 %v1217
    %v1319 = vunpack.c.l.b16 %v1218
    %v1320 = vunpack.c.l.b16 %v1219
    %v1321 = vunpack.c.l.b16 %v1220
    %v1322 = vunpack.c.l.b16 %v1221
    %v1323 = vunpack.c.l.b16 %v1222
    %v1324 = vunpack.c.l.b16 %v1223
    %v1325 = vunpack.c.l.b16 %v1224
    %v1326 = vunpack.c.l.b16 %v1225
    %v1327 = vunpack.c.l.b16 %v1226
    %v1328 = vunpack.c.l.b16 %v1227
    %v1329 = vunpack.c.l.b16 %v1228
    %v1330 = vunpack.c.l.b16 %v1229
    %v1331 = vunpack.c.l.b16 %v1230
    %v1332 = vunpack.c.l.b16 %v1231
    %v1333 = vunpack.c.l.b16 %v1232
    %v1334 = vunpack.c.l.b16 %v1233
    %v1335 = vunpack.c.l.b16 %v1234
    %v1336 = vunpack.c.l.b16 %v1235
    %v1337 = vunpack.c.l.b16 %v1236
    %v1338 = vunpack.c.l.b16 %v1237
    %v1339 = vunpack.c.l.b16 %v1238
    %v1340 = vunpack.c.l.b16 %v1239
    %v1341 = vunpack.c.l.b16 %v1240
    %v1342 = vunpack.c.l.b16 %v1241
    %v1343 = vunpack.c.l.b16 %v1242
    %v1344 = vunpack.c.l.b16 %v1243
    %v1345 = vunpack.c.l.b16 %v1244
    %v1346 = vunpack.c.l.b16 %v1245
    %v1347 = vunpack.c.l.b16 %v1246
    %v1348 = vunpack.c.l.b16 %v1247
    %v1349 = vunpack.c.l.b16 %v1248
    %v1350 = vunpack.c.l.b16 %v1249
    %v1351 = vpack.c.b16 %v1304, %v1303
    %v1352 = vpack.c.b16 %v1306, %v1305
    %v1353 = vpack.c.b16 %v1308, %v1307
    %v1354 = vpack.c.b16 %v1310, %v1309
    %v1355 = vpack.c.b16 %v1312, %v1311
    %v1356 = vpack.c.b16 %v1314, %v1313
    %v1357 = vpack.c.b16 %v1316, %v1315
    %v1358 = vpack.c.b16 %v1318, %v1317
    %v1359 = vpack.c.b16 %v1320, %v1319
    %v1360 = vpack.c.b16 %v1322, %v1321
    %v1361 = vpack.c.b16 %v1324, %v1323
    %v1362 = vpack.c.b16 %v1326, %v1325
    %v1363 = vpack.c.b16 %v1328, %v1327
    %v1364 = vpack.c.b16 %v1330, %v1329
    %v1365 = vpack.c.b16 %v1332, %v1331
    %v1366 = vpack.c.b16 %v1334, %v1333
    %v1367 = vpack.c.b16 %v1336, %v1335
    %v1368 = vpack.c.b16 %v1338, %v1337
    %v1369 = vpack.c.b16 %v1340, %v1339
    %v1370 = vpack.c.b16 %v1342, %v1341
    %v1371 = vpack.c.b16 %v1344, %v1343
    %v1372 = vpack.c.b16 %v1346, %v1345
    %v1373 = vpack.c.b16 %v1348, %v1347
    %v1374 = vpack.c.b16 %v1350, %v1349
    %1399 = vmatprep.subr.bf16.mxu0 0
    %1400 = vmatpush1.bf16.msra.mxu0 %v1351
    %1401 = vmatprep.subr.bf16.mxu0 0
    %1402 = vmatpush1.bf16.msra.mxu0 %v1352
    %1403 = vmatprep.subr.bf16.mxu0 0
    %1404 = vmatpush1.bf16.msra.mxu0 %v1353
    %1405 = vmatprep.subr.bf16.mxu0 0
    %1406 = vmatpush1.bf16.msra.mxu0 %v1354
    %1407 = vmatprep.subr.bf16.mxu0 0
    %1408 = vmatpush1.bf16.msra.mxu0 %v1355
    %1409 = vmatprep.subr.bf16.mxu0 0
    %1410 = vmatpush1.bf16.msra.mxu0 %v1356
    %1411 = vmatprep.subr.bf16.mxu0 0
    %1412 = vmatpush1.bf16.msra.mxu0 %v1357
    %1413 = vmatprep.subr.bf16.mxu0 0
    %1414 = vmatpush1.bf16.msra.mxu0 %v1358
    %1415 = vmatprep.subr.bf16.mxu0 0
    %1416 = vmatpush1.bf16.msra.mxu0 %v1359
    %1417 = vmatprep.subr.bf16.mxu0 0
    %1418 = vmatpush1.bf16.msra.mxu0 %v1360
    %1419 = vmatprep.subr.bf16.mxu0 0
    %1420 = vmatpush1.bf16.msra.mxu0 %v1361
    %1421 = vmatprep.subr.bf16.mxu0 0
    %1422 = vmatpush1.bf16.msra.mxu0 %v1362
    %1423 = vmatprep.subr.bf16.mxu0 0
    %1424 = vmatpush1.bf16.msra.mxu0 %v1363
    %1425 = vmatprep.subr.bf16.mxu0 0
    %1426 = vmatpush1.bf16.msra.mxu0 %v1364
    %1427 = vmatprep.subr.bf16.mxu0 0
    %1428 = vmatpush1.bf16.msra.mxu0 %v1365
    %1429 = vmatprep.subr.bf16.mxu0 0
    %1430 = vmatpush1.bf16.msra.mxu0 %v1366
    %1431 = vmatprep.mubr.bf16.mxu0 %v1200
    %1432 = vmatmul.mubr.bf16.gmra.mrb[0].mxu0 %v1199
    %v1433 = vpop.f32.mrb[0].mxu0
    %v1434 = vadd.f32 %v1254, %v1433
    %v1435 = vpop.f32.mrb[0].mxu0
    %v1436 = vpop.f32.mrb[0].mxu0
    %v1437 = vadd.f32 %v1254, %v1436
    %v1438 = vpop.f32.mrb[0].mxu0
    %1439 = vdwg.mxu0
    %1440 = vmatprep.subr.bf16.mxu0 0
    %1441 = vmatpush1.bf16.msra.mxu0 %v1367
    %1442 = vmatprep.subr.bf16.mxu0 0
    %1443 = vmatpush1.bf16.msra.mxu0 %v1368
    %1444 = vmatprep.subr.bf16.mxu0 0
    %1445 = vmatpush1.bf16.msra.mxu0 %v1369
    %1446 = vmatprep.subr.bf16.mxu0 0
    %1447 = vmatpush1.bf16.msra.mxu0 %v1370
    %1448 = vmatprep.subr.bf16.mxu0 0
    %1449 = vmatpush1.bf16.msra.mxu0 %v1371
    %1450 = vmatprep.subr.bf16.mxu0 0
    %1451 = vmatpush1.bf16.msra.mxu0 %v1372
    %1452 = vmatprep.subr.bf16.mxu0 0
    %1453 = vmatpush1.bf16.msra.mxu0 %v1373
    %1454 = vmatprep.subr.bf16.mxu0 0
    %1455 = vmatpush1.bf16.msra.mxu0 %v1374
    %1456 = vmatprep.subr.bf16.mxu0 0
    %1457 = vmatpush1.bf16.msra.mxu0 0
    %1458 = vmatprep.subr.bf16.mxu0 0
    %1459 = vmatpush1.bf16.msra.mxu0 0
    %1460 = vmatprep.subr.bf16.mxu0 0
    %1461 = vmatpush1.bf16.msra.mxu0 0
    %1462 = vmatprep.subr.bf16.mxu0 0
    %1463 = vmatpush1.bf16.msra.mxu0 0
    %1464 = vmatprep.subr.bf16.mxu0 0
    %1465 = vmatpush1.bf16.msra.mxu0 0
    %1466 = vmatprep.subr.bf16.mxu0 0
    %1467 = vmatpush1.bf16.msra.mxu0 0
    %1468 = vmatprep.subr.bf16.mxu0 0
    %1469 = vmatpush1.bf16.msra.mxu0 0
    %1470 = vmatprep.subr.bf16.mxu0 0
    %1471 = vmatpush1.bf16.msra.mxu0 0
    %1472 = vmatprep.mubr.bf16.mxu0 0
    %1473 = vmatmul.mubr.bf16.gmra.mrb[0].mxu0 %v1201
    %v1474 = vpop.f32.mrb[0].mxu0
    %v1475 = vadd.f32 %v1434, %v1474
    %v1476 = vpop.f32.mrb[0].mxu0
    %v1477 = vpop.f32.mrb[0].mxu0
    %v1478 = vadd.f32 %v1437, %v1477
    %v1479 = vpop.f32.mrb[0].mxu0
    %1480 = vdwg.mxu0
    %v1481 = vld [vmem:[#allocation14] sm:$0xf]
    %v1482 = vld [vmem:[#allocation14 + $0x4] sm:$0xf]
    %v1483 = vld [vmem:[#allocation14 + $0x8] sm:$0xf]
    %v1484 = vld [vmem:[#allocation14 + $0xc] sm:$0xf]
    %v1485 = vld [vmem:[#allocation14 + $0x10] sm:$0xf]
    %v1486 = vld [vmem:[#allocation14 + $0x14] sm:$0xf]
    %v1487 = vld [vmem:[#allocation14 + $0x18] sm:$0xf]
    %v1488 = vld [vmem:[#allocation14 + $0x1c] sm:$0xf]
    %v1489 = vld [vmem:[#allocation14 + $0x20] sm:$0xf]
    %v1490 = vld [vmem:[#allocation14 + $0x24] sm:$0xf]
    %v1491 = vld [vmem:[#allocation14 + $0x28] sm:$0xf]
    %v1492 = vld [vmem:[#allocation14 + $0x2c] sm:$0xf]
    %v1493 = vld [vmem:[#allocation14 + $0x30] sm:$0xf]
    %v1494 = vld [vmem:[#allocation14 + $0x34] sm:$0xf]
    %v1495 = vld [vmem:[#allocation14 + $0x38] sm:$0xf]
    %v1496 = vld [vmem:[#allocation14 + $0x3c] sm:$0xf]
    %v1497 = vld [vmem:[#allocation20 + $0x5] sm:$0x1]
    %v1498 = vlaneseq
    %v1499 = vshrl.u32 %v1498, 7
    %v1500 = vsub.s32 0, %v1499
    %v1501 = vrot.slane %v1497, %v1500
    %v1518 = vunpack.c.l.b16 %v1481
    %v1519 = vunpack.c.l.b16 %v1482
    %v1520 = vunpack.c.l.b16 %v1483
    %v1521 = vunpack.c.l.b16 %v1484
    %v1522 = vunpack.c.l.b16 %v1485
    %v1523 = vunpack.c.l.b16 %v1486
    %v1524 = vunpack.c.l.b16 %v1487
    %v1525 = vunpack.c.l.b16 %v1488
    %v1526 = vunpack.c.l.b16 %v1489
    %v1527 = vunpack.c.l.b16 %v1490
    %v1528 = vunpack.c.l.b16 %v1491
    %v1529 = vunpack.c.l.b16 %v1492
    %v1530 = vunpack.c.l.b16 %v1493
    %v1531 = vunpack.c.l.b16 %v1494
    %v1532 = vunpack.c.l.b16 %v1495
    %v1533 = vunpack.c.l.b16 %v1496
    %v1534 = vpack.c.b16 %v1519, %v1518
    %v1535 = vpack.c.b16 %v1521, %v1520
    %v1536 = vpack.c.b16 %v1523, %v1522
    %v1537 = vpack.c.b16 %v1525, %v1524
    %v1538 = vpack.c.b16 %v1527, %v1526
    %v1539 = vpack.c.b16 %v1529, %v1528
    %v1540 = vpack.c.b16 %v1531, %v1530
    %v1541 = vpack.c.b16 %v1533, %v1532
    %1550 = vmatprep.subr.bf16.mxu0 0
    %1551 = vmatpush1.bf16.msra.mxu0 %v1534
    %1552 = vmatprep.subr.bf16.mxu0 0
    %1553 = vmatpush1.bf16.msra.mxu0 %v1535
    %1554 = vmatprep.subr.bf16.mxu0 0
    %1555 = vmatpush1.bf16.msra.mxu0 %v1536
    %1556 = vmatprep.subr.bf16.mxu0 0
    %1557 = vmatpush1.bf16.msra.mxu0 %v1537
    %1558 = vmatprep.subr.bf16.mxu0 0
    %1559 = vmatpush1.bf16.msra.mxu0 %v1538
    %1560 = vmatprep.subr.bf16.mxu0 0
    %1561 = vmatpush1.bf16.msra.mxu0 %v1539
    %1562 = vmatprep.subr.bf16.mxu0 0
    %1563 = vmatpush1.bf16.msra.mxu0 %v1540
    %1564 = vmatprep.subr.bf16.mxu0 0
    %1565 = vmatpush1.bf16.msra.mxu0 %v1541
    %1566 = vmatprep.subr.bf16.mxu0 0
    %1567 = vmatpush1.bf16.msra.mxu0 0
    %1568 = vmatprep.subr.bf16.mxu0 0
    %1569 = vmatpush1.bf16.msra.mxu0 0
    %1570 = vmatprep.subr.bf16.mxu0 0
    %1571 = vmatpush1.bf16.msra.mxu0 0
    %1572 = vmatprep.subr.bf16.mxu0 0
    %1573 = vmatpush1.bf16.msra.mxu0 0
    %1574 = vmatprep.subr.bf16.mxu0 0
    %1575 = vmatpush1.bf16.msra.mxu0 0
    %1576 = vmatprep.subr.bf16.mxu0 0
    %1577 = vmatpush1.bf16.msra.mxu0 0
    %1578 = vmatprep.subr.bf16.mxu0 0
    %1579 = vmatpush1.bf16.msra.mxu0 0
    %1580 = vmatprep.subr.bf16.mxu0 0
    %1581 = vmatpush1.bf16.msra.mxu0 0
    %1582 = vmatprep.mubr.bf16.mxu0 0
    %1583 = vmatmul.mubr.bf16.gmra.mrb[0].mxu0 %v890
    %v1584 = vpop.f32.mrb[0].mxu0
    %v1585 = vadd.f32 %v1501, %v1584
    %v1586 = vpop.f32.mrb[0].mxu0
    %v1587 = vpop.f32.mrb[0].mxu0
    %v1588 = vadd.f32 %v1501, %v1587
    %v1589 = vpop.f32.mrb[0].mxu0
    %1590 = vdwg.mxu0
    %v1591 = vadd.f32 %v1475, %v1585
    %v1592 = vadd.f32 %v1478, %v1588
    %v1593 = vmax.f32 %v1591, 0.0
    %v1594 = vmax.f32 %v1592, 0.0
    %v1595 = vrot.slane %v1593, 7
    %v1596 = vrot.slane %v1594, 7
    %v1597 = vsel %vm212, %v1595, %v1596
    %v1598 = vsel %vm212, %v1596, %v1595
    %v1599 = vsel %vm1185, 0.0, %v1598
    %v1600 = vsel %vm1186, 0.0, %v1597
    %v1601 = vrot.slane %v1593, 1
    %v1602 = vrot.slane %v1594, 1
    %v1603 = vsel %vm233, %v1601, %v1602
    %v1604 = vsel %vm233, %v1602, %v1601
    %v1605 = vsel %vm1195, 0.0, %v1603
    %v1606 = vsel %vm1196, 0.0, %v1604
    %1607 = vst [vmem:[#allocation2] sm:$0xff] %v1599
    %1608 = vst [vmem:[#allocation2 + $0x8] sm:$0xff] %v1600
    %v1609 = vld [vmem:[#allocation2] ss:$2 sm:$0xff]
    %1610 = vst [vmem:[#allocation2] sm:$0xff] %v1593
    %1611 = vst [vmem:[#allocation2 + $0x8] sm:$0xff] %v1594
    %v1612 = vld [vmem:[#allocation2] ss:$2 sm:$0xff]
    %1613 = vst [vmem:[#allocation2] sm:$0xff] %v1605
    %1614 = vst [vmem:[#allocation2 + $0x8] sm:$0xff] %v1606
    %v1615 = vld [vmem:[#allocation2] ss:$2 sm:$0xff]
    %v1616 = vpack.c.bf16 %v1609, %v1609
    %v1617 = vpack.c.bf16 %v1612, %v1612
    %v1618 = vpack.c.bf16 %v1615, %v1615
    %v1619 = vld [vmem:[#allocation15] sm:$0xf]
    %v1620 = vld [vmem:[#allocation15 + $0x4] sm:$0xf]
    %v1621 = vld [vmem:[#allocation15 + $0x8] sm:$0xf]
    %v1622 = vld [vmem:[#allocation15 + $0xc] sm:$0xf]
    %v1623 = vld [vmem:[#allocation15 + $0x10] sm:$0xf]
    %v1624 = vld [vmem:[#allocation15 + $0x14] sm:$0xf]
    %v1625 = vld [vmem:[#allocation15 + $0x18] sm:$0xf]
    %v1626 = vld [vmem:[#allocation15 + $0x1c] sm:$0xf]
    %v1627 = vld [vmem:[#allocation15 + $0x20] sm:$0xf]
    %v1628 = vld [vmem:[#allocation15 + $0x24] sm:$0xf]
    %v1629 = vld [vmem:[#allocation15 + $0x28] sm:$0xf]
    %v1630 = vld [vmem:[#allocation15 + $0x2c] sm:$0xf]
    %v1631 = vld [vmem:[#allocation15 + $0x30] sm:$0xf]
    %v1632 = vld [vmem:[#allocation15 + $0x34] sm:$0xf]
    %v1633 = vld [vmem:[#allocation15 + $0x38] sm:$0xf]
    %v1634 = vld [vmem:[#allocation15 + $0x3c] sm:$0xf]
    %v1635 = vld [vmem:[#allocation15 + $0x40] sm:$0xf]
    %v1636 = vld [vmem:[#allocation15 + $0x44] sm:$0xf]
    %v1637 = vld [vmem:[#allocation15 + $0x48] sm:$0xf]
    %v1638 = vld [vmem:[#allocation15 + $0x4c] sm:$0xf]
    %v1639 = vld [vmem:[#allocation15 + $0x50] sm:$0xf]
    %v1640 = vld [vmem:[#allocation15 + $0x54] sm:$0xf]
    %v1641 = vld [vmem:[#allocation15 + $0x58] sm:$0xf]
    %v1642 = vld [vmem:[#allocation15 + $0x5c] sm:$0xf]
    %v1643 = vld [vmem:[#allocation15 + $0x60] sm:$0xf]
    %v1644 = vld [vmem:[#allocation15 + $0x64] sm:$0xf]
    %v1645 = vld [vmem:[#allocation15 + $0x68] sm:$0xf]
    %v1646 = vld [vmem:[#allocation15 + $0x6c] sm:$0xf]
    %v1647 = vld [vmem:[#allocation15 + $0x70] sm:$0xf]
    %v1648 = vld [vmem:[#allocation15 + $0x74] sm:$0xf]
    %v1649 = vld [vmem:[#allocation15 + $0x78] sm:$0xf]
    %v1650 = vld [vmem:[#allocation15 + $0x7c] sm:$0xf]
    %v1651 = vld [vmem:[#allocation15 + $0x80] sm:$0xf]
    %v1652 = vld [vmem:[#allocation15 + $0x84] sm:$0xf]
    %v1653 = vld [vmem:[#allocation15 + $0x88] sm:$0xf]
    %v1654 = vld [vmem:[#allocation15 + $0x8c] sm:$0xf]
    %v1655 = vld [vmem:[#allocation15 + $0x90] sm:$0xf]
    %v1656 = vld [vmem:[#allocation15 + $0x94] sm:$0xf]
    %v1657 = vld [vmem:[#allocation15 + $0x98] sm:$0xf]
    %v1658 = vld [vmem:[#allocation15 + $0x9c] sm:$0xf]
    %v1659 = vld [vmem:[#allocation15 + $0xa0] sm:$0xf]
    %v1660 = vld [vmem:[#allocation15 + $0xa4] sm:$0xf]
    %v1661 = vld [vmem:[#allocation15 + $0xa8] sm:$0xf]
    %v1662 = vld [vmem:[#allocation15 + $0xac] sm:$0xf]
    %v1663 = vld [vmem:[#allocation15 + $0xb0] sm:$0xf]
    %v1664 = vld [vmem:[#allocation15 + $0xb4] sm:$0xf]
    %v1665 = vld [vmem:[#allocation15 + $0xb8] sm:$0xf]
    %v1666 = vld [vmem:[#allocation15 + $0xbc] sm:$0xf]
    %v1667 = vld [vmem:[#allocation20 + $0x6] sm:$0x1]
    %v1668 = vlaneseq
    %v1669 = vshrl.u32 %v1668, 7
    %v1670 = vsub.s32 0, %v1669
    %v1671 = vrot.slane %v1667, %v1670
    %v1720 = vunpack.c.l.b16 %v1619
    %v1721 = vunpack.c.l.b16 %v1620
    %v1722 = vunpack.c.l.b16 %v1621
    %v1723 = vunpack.c.l.b16 %v1622
    %v1724 = vunpack.c.l.b16 %v1623
    %v1725 = vunpack.c.l.b16 %v1624
    %v1726 = vunpack.c.l.b16 %v1625
    %v1727 = vunpack.c.l.b16 %v1626
    %v1728 = vunpack.c.l.b16 %v1627
    %v1729 = vunpack.c.l.b16 %v1628
    %v1730 = vunpack.c.l.b16 %v1629
    %v1731 = vunpack.c.l.b16 %v1630
    %v1732 = vunpack.c.l.b16 %v1631
    %v1733 = vunpack.c.l.b16 %v1632
    %v1734 = vunpack.c.l.b16 %v1633
    %v1735 = vunpack.c.l.b16 %v1634
    %v1736 = vunpack.c.l.b16 %v1635
    %v1737 = vunpack.c.l.b16 %v1636
    %v1738 = vunpack.c.l.b16 %v1637
    %v1739 = vunpack.c.l.b16 %v1638
    %v1740 = vunpack.c.l.b16 %v1639
    %v1741 = vunpack.c.l.b16 %v1640
    %v1742 = vunpack.c.l.b16 %v1641
    %v1743 = vunpack.c.l.b16 %v1642
    %v1744 = vunpack.c.l.b16 %v1643
    %v1745 = vunpack.c.l.b16 %v1644
    %v1746 = vunpack.c.l.b16 %v1645
    %v1747 = vunpack.c.l.b16 %v1646
    %v1748 = vunpack.c.l.b16 %v1647
    %v1749 = vunpack.c.l.b16 %v1648
    %v1750 = vunpack.c.l.b16 %v1649
    %v1751 = vunpack.c.l.b16 %v1650
    %v1752 = vunpack.c.l.b16 %v1651
    %v1753 = vunpack.c.l.b16 %v1652
    %v1754 = vunpack.c.l.b16 %v1653
    %v1755 = vunpack.c.l.b16 %v1654
    %v1756 = vunpack.c.l.b16 %v1655
    %v1757 = vunpack.c.l.b16 %v1656
    %v1758 = vunpack.c.l.b16 %v1657
    %v1759 = vunpack.c.l.b16 %v1658
    %v1760 = vunpack.c.l.b16 %v1659
    %v1761 = vunpack.c.l.b16 %v1660
    %v1762 = vunpack.c.l.b16 %v1661
    %v1763 = vunpack.c.l.b16 %v1662
    %v1764 = vunpack.c.l.b16 %v1663
    %v1765 = vunpack.c.l.b16 %v1664
    %v1766 = vunpack.c.l.b16 %v1665
    %v1767 = vunpack.c.l.b16 %v1666
    %v1768 = vpack.c.b16 %v1721, %v1720
    %v1769 = vpack.c.b16 %v1723, %v1722
    %v1770 = vpack.c.b16 %v1725, %v1724
    %v1771 = vpack.c.b16 %v1727, %v1726
    %v1772 = vpack.c.b16 %v1729, %v1728
    %v1773 = vpack.c.b16 %v1731, %v1730
    %v1774 = vpack.c.b16 %v1733, %v1732
    %v1775 = vpack.c.b16 %v1735, %v1734
    %v1776 = vpack.c.b16 %v1737, %v1736
    %v1777 = vpack.c.b16 %v1739, %v1738
    %v1778 = vpack.c.b16 %v1741, %v1740
    %v1779 = vpack.c.b16 %v1743, %v1742
    %v1780 = vpack.c.b16 %v1745, %v1744
    %v1781 = vpack.c.b16 %v1747, %v1746
    %v1782 = vpack.c.b16 %v1749, %v1748
    %v1783 = vpack.c.b16 %v1751, %v1750
    %v1784 = vpack.c.b16 %v1753, %v1752
    %v1785 = vpack.c.b16 %v1755, %v1754
    %v1786 = vpack.c.b16 %v1757, %v1756
    %v1787 = vpack.c.b16 %v1759, %v1758
    %v1788 = vpack.c.b16 %v1761, %v1760
    %v1789 = vpack.c.b16 %v1763, %v1762
    %v1790 = vpack.c.b16 %v1765, %v1764
    %v1791 = vpack.c.b16 %v1767, %v1766
    %1816 = vmatprep.subr.bf16.mxu0 0
    %1817 = vmatpush1.bf16.msra.mxu0 %v1768
    %1818 = vmatprep.subr.bf16.mxu0 0
    %1819 = vmatpush1.bf16.msra.mxu0 %v1769
    %1820 = vmatprep.subr.bf16.mxu0 0
    %1821 = vmatpush1.bf16.msra.mxu0 %v1770
    %1822 = vmatprep.subr.bf16.mxu0 0
    %1823 = vmatpush1.bf16.msra.mxu0 %v1771
    %1824 = vmatprep.subr.bf16.mxu0 0
    %1825 = vmatpush1.bf16.msra.mxu0 %v1772
    %1826 = vmatprep.subr.bf16.mxu0 0
    %1827 = vmatpush1.bf16.msra.mxu0 %v1773
    %1828 = vmatprep.subr.bf16.mxu0 0
    %1829 = vmatpush1.bf16.msra.mxu0 %v1774
    %1830 = vmatprep.subr.bf16.mxu0 0
    %1831 = vmatpush1.bf16.msra.mxu0 %v1775
    %1832 = vmatprep.subr.bf16.mxu0 0
    %1833 = vmatpush1.bf16.msra.mxu0 %v1776
    %1834 = vmatprep.subr.bf16.mxu0 0
    %1835 = vmatpush1.bf16.msra.mxu0 %v1777
    %1836 = vmatprep.subr.bf16.mxu0 0
    %1837 = vmatpush1.bf16.msra.mxu0 %v1778
    %1838 = vmatprep.subr.bf16.mxu0 0
    %1839 = vmatpush1.bf16.msra.mxu0 %v1779
    %1840 = vmatprep.subr.bf16.mxu0 0
    %1841 = vmatpush1.bf16.msra.mxu0 %v1780
    %1842 = vmatprep.subr.bf16.mxu0 0
    %1843 = vmatpush1.bf16.msra.mxu0 %v1781
    %1844 = vmatprep.subr.bf16.mxu0 0
    %1845 = vmatpush1.bf16.msra.mxu0 %v1782
    %1846 = vmatprep.subr.bf16.mxu0 0
    %1847 = vmatpush1.bf16.msra.mxu0 %v1783
    %1848 = vmatprep.mubr.bf16.mxu0 %v1617
    %1849 = vmatmul.mubr.bf16.gmra.mrb[0].mxu0 %v1616
    %v1850 = vpop.f32.mrb[0].mxu0
    %v1851 = vadd.f32 %v1671, %v1850
    %v1852 = vpop.f32.mrb[0].mxu0
    %v1853 = vpop.f32.mrb[0].mxu0
    %v1854 = vpop.f32.mrb[0].mxu0
    %1855 = vdwg.mxu0
    %1856 = vmatprep.subr.bf16.mxu0 0
    %1857 = vmatpush1.bf16.msra.mxu0 %v1784
    %1858 = vmatprep.subr.bf16.mxu0 0
    %1859 = vmatpush1.bf16.msra.mxu0 %v1785
    %1860 = vmatprep.subr.bf16.mxu0 0
    %1861 = vmatpush1.bf16.msra.mxu0 %v1786
    %1862 = vmatprep.subr.bf16.mxu0 0
    %1863 = vmatpush1.bf16.msra.mxu0 %v1787
    %1864 = vmatprep.subr.bf16.mxu0 0
    %1865 = vmatpush1.bf16.msra.mxu0 %v1788
    %1866 = vmatprep.subr.bf16.mxu0 0
    %1867 = vmatpush1.bf16.msra.mxu0 %v1789
    %1868 = vmatprep.subr.bf16.mxu0 0
    %1869 = vmatpush1.bf16.msra.mxu0 %v1790
    %1870 = vmatprep.subr.bf16.mxu0 0
    %1871 = vmatpush1.bf16.msra.mxu0 %v1791
    %1872 = vmatprep.subr.bf16.mxu0 0
    %1873 = vmatpush1.bf16.msra.mxu0 0
    %1874 = vmatprep.subr.bf16.mxu0 0
    %1875 = vmatpush1.bf16.msra.mxu0 0
    %1876 = vmatprep.subr.bf16.mxu0 0
    %1877 = vmatpush1.bf16.msra.mxu0 0
    %1878 = vmatprep.subr.bf16.mxu0 0
    %1879 = vmatpush1.bf16.msra.mxu0 0
    %1880 = vmatprep.subr.bf16.mxu0 0
    %1881 = vmatpush1.bf16.msra.mxu0 0
    %1882 = vmatprep.subr.bf16.mxu0 0
    %1883 = vmatpush1.bf16.msra.mxu0 0
    %1884 = vmatprep.subr.bf16.mxu0 0
    %1885 = vmatpush1.bf16.msra.mxu0 0
    %1886 = vmatprep.subr.bf16.mxu0 0
    %1887 = vmatpush1.bf16.msra.mxu0 0
    %1888 = vmatprep.mubr.bf16.mxu0 0
    %1889 = vmatmul.mubr.bf16.gmra.mrb[0].mxu0 %v1618
    %v1890 = vpop.f32.mrb[0].mxu0
    %v1891 = vadd.f32 %v1851, %v1890
    %v1892 = vpop.f32.mrb[0].mxu0
    %v1893 = vpop.f32.mrb[0].mxu0
    %v1894 = vpop.f32.mrb[0].mxu0
    %1895 = vdwg.mxu0
    %v1896 = vmax.f32 %v1891, 0.0
    %v1897 = vand.u32 %v192, 3
    %vm1898 = vcmp.eq.s32.totalorder %v1897, 0
    %vm1899 = vcmp.eq.s32.totalorder %v1897, 3
    %v1900 = vrot.slane %v1896, 7
    %v1901 = vsel %vm1898, 1, 0
    %vm1902 = vcmp.eq.s32.totalorder %v1901, 1
    %v1903 = vsel %vm1902, 0.0, %v1900
    %v1904 = vrot.slane %v1896, 1
    %v1905 = vsel %vm1899, 1, 0
    %vm1906 = vcmp.eq.s32.totalorder %v1905, 1
    %v1907 = vsel %vm1906, 0.0, %v1904
    %v1908 = vpack.c.bf16 %v1903, %v1903
    %v1909 = vpack.c.bf16 %v1896, %v1896
    %v1910 = vpack.c.bf16 %v1907, %v1907
    %v1911 = vld [vmem:[#allocation17] sm:$0xf]
    %v1912 = vld [vmem:[#allocation17 + $0x4] sm:$0xf]
    %v1913 = vld [vmem:[#allocation17 + $0x8] sm:$0xf]
    %v1914 = vld [vmem:[#allocation17 + $0xc] sm:$0xf]
    %v1915 = vld [vmem:[#allocation17 + $0x10] sm:$0xf]
    %v1916 = vld [vmem:[#allocation17 + $0x14] sm:$0xf]
    %v1917 = vld [vmem:[#allocation17 + $0x18] sm:$0xf]
    %v1918 = vld [vmem:[#allocation17 + $0x1c] sm:$0xf]
    %v1919 = vld [vmem:[#allocation17 + $0x20] sm:$0xf]
    %v1920 = vld [vmem:[#allocation17 + $0x24] sm:$0xf]
    %v1921 = vld [vmem:[#allocation17 + $0x28] sm:$0xf]
    %v1922 = vld [vmem:[#allocation17 + $0x2c] sm:$0xf]
    %v1923 = vld [vmem:[#allocation17 + $0x30] sm:$0xf]
    %v1924 = vld [vmem:[#allocation17 + $0x34] sm:$0xf]
    %v1925 = vld [vmem:[#allocation17 + $0x38] sm:$0xf]
    %v1926 = vld [vmem:[#allocation17 + $0x3c] sm:$0xf]
    %v1927 = vld [vmem:[#allocation17 + $0x40] sm:$0xf]
    %v1928 = vld [vmem:[#allocation17 + $0x44] sm:$0xf]
    %v1929 = vld [vmem:[#allocation17 + $0x48] sm:$0xf]
    %v1930 = vld [vmem:[#allocation17 + $0x4c] sm:$0xf]
    %v1931 = vld [vmem:[#allocation17 + $0x50] sm:$0xf]
    %v1932 = vld [vmem:[#allocation17 + $0x54] sm:$0xf]
    %v1933 = vld [vmem:[#allocation17 + $0x58] sm:$0xf]
    %v1934 = vld [vmem:[#allocation17 + $0x5c] sm:$0xf]
    %v1935 = vld [vmem:[#allocation17 + $0x60] sm:$0xf]
    %v1936 = vld [vmem:[#allocation17 + $0x64] sm:$0xf]
    %v1937 = vld [vmem:[#allocation17 + $0x68] sm:$0xf]
    %v1938 = vld [vmem:[#allocation17 + $0x6c] sm:$0xf]
    %v1939 = vld [vmem:[#allocation17 + $0x70] sm:$0xf]
    %v1940 = vld [vmem:[#allocation17 + $0x74] sm:$0xf]
    %v1941 = vld [vmem:[#allocation17 + $0x78] sm:$0xf]
    %v1942 = vld [vmem:[#allocation17 + $0x7c] sm:$0xf]
    %v1943 = vld [vmem:[#allocation17 + $0x80] sm:$0xf]
    %v1944 = vld [vmem:[#allocation17 + $0x84] sm:$0xf]
    %v1945 = vld [vmem:[#allocation17 + $0x88] sm:$0xf]
    %v1946 = vld [vmem:[#allocation17 + $0x8c] sm:$0xf]
    %v1947 = vld [vmem:[#allocation17 + $0x90] sm:$0xf]
    %v1948 = vld [vmem:[#allocation17 + $0x94] sm:$0xf]
    %v1949 = vld [vmem:[#allocation17 + $0x98] sm:$0xf]
    %v1950 = vld [vmem:[#allocation17 + $0x9c] sm:$0xf]
    %v1951 = vld [vmem:[#allocation17 + $0xa0] sm:$0xf]
    %v1952 = vld [vmem:[#allocation17 + $0xa4] sm:$0xf]
    %v1953 = vld [vmem:[#allocation17 + $0xa8] sm:$0xf]
    %v1954 = vld [vmem:[#allocation17 + $0xac] sm:$0xf]
    %v1955 = vld [vmem:[#allocation17 + $0xb0] sm:$0xf]
    %v1956 = vld [vmem:[#allocation17 + $0xb4] sm:$0xf]
    %v1957 = vld [vmem:[#allocation17 + $0xb8] sm:$0xf]
    %v1958 = vld [vmem:[#allocation17 + $0xbc] sm:$0xf]
    %v1959 = vld [vmem:[#allocation20 + $0x7] sm:$0x1]
    %v1960 = vlaneseq
    %v1961 = vshrl.u32 %v1960, 7
    %v1962 = vsub.s32 0, %v1961
    %v1963 = vrot.slane %v1959, %v1962
    %v2012 = vunpack.c.l.b16 %v1911
    %v2013 = vunpack.c.l.b16 %v1912
    %v2014 = vunpack.c.l.b16 %v1913
    %v2015 = vunpack.c.l.b16 %v1914
    %v2016 = vunpack.c.l.b16 %v1915
    %v2017 = vunpack.c.l.b16 %v1916
    %v2018 = vunpack.c.l.b16 %v1917
    %v2019 = vunpack.c.l.b16 %v1918
    %v2020 = vunpack.c.l.b16 %v1919
    %v2021 = vunpack.c.l.b16 %v1920
    %v2022 = vunpack.c.l.b16 %v1921
    %v2023 = vunpack.c.l.b16 %v1922
    %v2024 = vunpack.c.l.b16 %v1923
    %v2025 = vunpack.c.l.b16 %v1924
    %v2026 = vunpack.c.l.b16 %v1925
    %v2027 = vunpack.c.l.b16 %v1926
    %v2028 = vunpack.c.l.b16 %v1927
    %v2029 = vunpack.c.l.b16 %v1928
    %v2030 = vunpack.c.l.b16 %v1929
    %v2031 = vunpack.c.l.b16 %v1930
    %v2032 = vunpack.c.l.b16 %v1931
    %v2033 = vunpack.c.l.b16 %v1932
    %v2034 = vunpack.c.l.b16 %v1933
    %v2035 = vunpack.c.l.b16 %v1934
    %v2036 = vunpack.c.l.b16 %v1935
    %v2037 = vunpack.c.l.b16 %v1936
    %v2038 = vunpack.c.l.b16 %v1937
    %v2039 = vunpack.c.l.b16 %v1938
    %v2040 = vunpack.c.l.b16 %v1939
    %v2041 = vunpack.c.l.b16 %v1940
    %v2042 = vunpack.c.l.b16 %v1941
    %v2043 = vunpack.c.l.b16 %v1942
    %v2044 = vunpack.c.l.b16 %v1943
    %v2045 = vunpack.c.l.b16 %v1944
    %v2046 = vunpack.c.l.b16 %v1945
    %v2047 = vunpack.c.l.b16 %v1946
    %v2048 = vunpack.c.l.b16 %v1947
    %v2049 = vunpack.c.l.b16 %v1948
    %v2050 = vunpack.c.l.b16 %v1949
    %v2051 = vunpack.c.l.b16 %v1950
    %v2052 = vunpack.c.l.b16 %v1951
    %v2053 = vunpack.c.l.b16 %v1952
    %v2054 = vunpack.c.l.b16 %v1953
    %v2055 = vunpack.c.l.b16 %v1954
    %v2056 = vunpack.c.l.b16 %v1955
    %v2057 = vunpack.c.l.b16 %v1956
    %v2058 = vunpack.c.l.b16 %v1957
    %v2059 = vunpack.c.l.b16 %v1958
    %v2060 = vpack.c.b16 %v2013, %v2012
    %v2061 = vpack.c.b16 %v2015, %v2014
    %v2062 = vpack.c.b16 %v2017, %v2016
    %v2063 = vpack.c.b16 %v2019, %v2018
    %v2064 = vpack.c.b16 %v2021, %v2020
    %v2065 = vpack.c.b16 %v2023, %v2022
    %v2066 = vpack.c.b16 %v2025, %v2024
    %v2067 = vpack.c.b16 %v2027, %v2026
    %v2068 = vpack.c.b16 %v2029, %v2028
    %v2069 = vpack.c.b16 %v2031, %v2030
    %v2070 = vpack.c.b16 %v2033, %v2032
    %v2071 = vpack.c.b16 %v2035, %v2034
    %v2072 = vpack.c.b16 %v2037, %v2036
    %v2073 = vpack.c.b16 %v2039, %v2038
    %v2074 = vpack.c.b16 %v2041, %v2040
    %v2075 = vpack.c.b16 %v2043, %v2042
    %v2076 = vpack.c.b16 %v2045, %v2044
    %v2077 = vpack.c.b16 %v2047, %v2046
    %v2078 = vpack.c.b16 %v2049, %v2048
    %v2079 = vpack.c.b16 %v2051, %v2050
    %v2080 = vpack.c.b16 %v2053, %v2052
    %v2081 = vpack.c.b16 %v2055, %v2054
    %v2082 = vpack.c.b16 %v2057, %v2056
    %v2083 = vpack.c.b16 %v2059, %v2058
    %2108 = vmatprep.subr.bf16.mxu0 0
    %2109 = vmatpush1.bf16.msra.mxu0 %v2060
    %2110 = vmatprep.subr.bf16.mxu0 0
    %2111 = vmatpush1.bf16.msra.mxu0 %v2061
    %2112 = vmatprep.subr.bf16.mxu0 0
    %2113 = vmatpush1.bf16.msra.mxu0 %v2062
    %2114 = vmatprep.subr.bf16.mxu0 0
    %2115 = vmatpush1.bf16.msra.mxu0 %v2063
    %2116 = vmatprep.subr.bf16.mxu0 0
    %2117 = vmatpush1.bf16.msra.mxu0 %v2064
    %2118 = vmatprep.subr.bf16.mxu0 0
    %2119 = vmatpush1.bf16.msra.mxu0 %v2065
    %2120 = vmatprep.subr.bf16.mxu0 0
    %2121 = vmatpush1.bf16.msra.mxu0 %v2066
    %2122 = vmatprep.subr.bf16.mxu0 0
    %2123 = vmatpush1.bf16.msra.mxu0 %v2067
    %2124 = vmatprep.subr.bf16.mxu0 0
    %2125 = vmatpush1.bf16.msra.mxu0 %v2068
    %2126 = vmatprep.subr.bf16.mxu0 0
    %2127 = vmatpush1.bf16.msra.mxu0 %v2069
    %2128 = vmatprep.subr.bf16.mxu0 0
    %2129 = vmatpush1.bf16.msra.mxu0 %v2070
    %2130 = vmatprep.subr.bf16.mxu0 0
    %2131 = vmatpush1.bf16.msra.mxu0 %v2071
    %2132 = vmatprep.subr.bf16.mxu0 0
    %2133 = vmatpush1.bf16.msra.mxu0 %v2072
    %2134 = vmatprep.subr.bf16.mxu0 0
    %2135 = vmatpush1.bf16.msra.mxu0 %v2073
    %2136 = vmatprep.subr.bf16.mxu0 0
    %2137 = vmatpush1.bf16.msra.mxu0 %v2074
    %2138 = vmatprep.subr.bf16.mxu0 0
    %2139 = vmatpush1.bf16.msra.mxu0 %v2075
    %2140 = vmatprep.mubr.bf16.mxu0 %v1909
    %2141 = vmatmul.mubr.bf16.gmra.mrb[0].mxu0 %v1908
    %v2142 = vpop.f32.mrb[0].mxu0
    %v2143 = vadd.f32 %v1963, %v2142
    %v2144 = vpop.f32.mrb[0].mxu0
    %v2145 = vpop.f32.mrb[0].mxu0
    %v2146 = vpop.f32.mrb[0].mxu0
    %2147 = vdwg.mxu0
    %2148 = vmatprep.subr.bf16.mxu0 0
    %2149 = vmatpush1.bf16.msra.mxu0 %v2076
    %2150 = vmatprep.subr.bf16.mxu0 0
    %2151 = vmatpush1.bf16.msra.mxu0 %v2077
    %2152 = vmatprep.subr.bf16.mxu0 0
    %2153 = vmatpush1.bf16.msra.mxu0 %v2078
    %2154 = vmatprep.subr.bf16.mxu0 0
    %2155 = vmatpush1.bf16.msra.mxu0 %v2079
    %2156 = vmatprep.subr.bf16.mxu0 0
    %2157 = vmatpush1.bf16.msra.mxu0 %v2080
    %2158 = vmatprep.subr.bf16.mxu0 0
    %2159 = vmatpush1.bf16.msra.mxu0 %v2081
    %2160 = vmatprep.subr.bf16.mxu0 0
    %2161 = vmatpush1.bf16.msra.mxu0 %v2082
    %2162 = vmatprep.subr.bf16.mxu0 0
    %2163 = vmatpush1.bf16.msra.mxu0 %v2083
    %2164 = vmatprep.subr.bf16.mxu0 0
    %2165 = vmatpush1.bf16.msra.mxu0 0
    %2166 = vmatprep.subr.bf16.mxu0 0
    %2167 = vmatpush1.bf16.msra.mxu0 0
    %2168 = vmatprep.subr.bf16.mxu0 0
    %2169 = vmatpush1.bf16.msra.mxu0 0
    %2170 = vmatprep.subr.bf16.mxu0 0
    %2171 = vmatpush1.bf16.msra.mxu0 0
    %2172 = vmatprep.subr.bf16.mxu0 0
    %2173 = vmatpush1.bf16.msra.mxu0 0
    %2174 = vmatprep.subr.bf16.mxu0 0
    %2175 = vmatpush1.bf16.msra.mxu0 0
    %2176 = vmatprep.subr.bf16.mxu0 0
    %2177 = vmatpush1.bf16.msra.mxu0 0
    %2178 = vmatprep.subr.bf16.mxu0 0
    %2179 = vmatpush1.bf16.msra.mxu0 0
    %2180 = vmatprep.mubr.bf16.mxu0 0
    %2181 = vmatmul.mubr.bf16.gmra.mrb[0].mxu0 %v1910
    %v2182 = vpop.f32.mrb[0].mxu0
    %v2183 = vadd.f32 %v2143, %v2182
    %v2184 = vpop.f32.mrb[0].mxu0
    %v2185 = vpop.f32.mrb[0].mxu0
    %v2186 = vpop.f32.mrb[0].mxu0
    %2187 = vdwg.mxu0
    %v2188 = vld [vmem:[#allocation18] sm:$0xf]
    %v2189 = vld [vmem:[#allocation18 + $0x4] sm:$0xf]
    %v2190 = vld [vmem:[#allocation18 + $0x8] sm:$0xf]
    %v2191 = vld [vmem:[#allocation18 + $0xc] sm:$0xf]
    %v2192 = vld [vmem:[#allocation18 + $0x10] sm:$0xf]
    %v2193 = vld [vmem:[#allocation18 + $0x14] sm:$0xf]
    %v2194 = vld [vmem:[#allocation18 + $0x18] sm:$0xf]
    %v2195 = vld [vmem:[#allocation18 + $0x1c] sm:$0xf]
    %v2196 = vld [vmem:[#allocation18 + $0x20] sm:$0xf]
    %v2197 = vld [vmem:[#allocation18 + $0x24] sm:$0xf]
    %v2198 = vld [vmem:[#allocation18 + $0x28] sm:$0xf]
    %v2199 = vld [vmem:[#allocation18 + $0x2c] sm:$0xf]
    %v2200 = vld [vmem:[#allocation18 + $0x30] sm:$0xf]
    %v2201 = vld [vmem:[#allocation18 + $0x34] sm:$0xf]
    %v2202 = vld [vmem:[#allocation18 + $0x38] sm:$0xf]
    %v2203 = vld [vmem:[#allocation18 + $0x3c] sm:$0xf]
    %v2204 = vld [vmem:[#allocation20 + $0x8] sm:$0x1]
    %v2205 = vlaneseq
    %v2206 = vshrl.u32 %v2205, 7
    %v2207 = vsub.s32 0, %v2206
    %v2208 = vrot.slane %v2204, %v2207
    %v2225 = vunpack.c.l.b16 %v2188
    %v2226 = vunpack.c.l.b16 %v2189
    %v2227 = vunpack.c.l.b16 %v2190
    %v2228 = vunpack.c.l.b16 %v2191
    %v2229 = vunpack.c.l.b16 %v2192
    %v2230 = vunpack.c.l.b16 %v2193
    %v2231 = vunpack.c.l.b16 %v2194
    %v2232 = vunpack.c.l.b16 %v2195
    %v2233 = vunpack.c.l.b16 %v2196
    %v2234 = vunpack.c.l.b16 %v2197
    %v2235 = vunpack.c.l.b16 %v2198
    %v2236 = vunpack.c.l.b16 %v2199
    %v2237 = vunpack.c.l.b16 %v2200
    %v2238 = vunpack.c.l.b16 %v2201
    %v2239 = vunpack.c.l.b16 %v2202
    %v2240 = vunpack.c.l.b16 %v2203
    %v2241 = vpack.c.b16 %v2226, %v2225
    %v2242 = vpack.c.b16 %v2228, %v2227
    %v2243 = vpack.c.b16 %v2230, %v2229
    %v2244 = vpack.c.b16 %v2232, %v2231
    %v2245 = vpack.c.b16 %v2234, %v2233
    %v2246 = vpack.c.b16 %v2236, %v2235
    %v2247 = vpack.c.b16 %v2238, %v2237
    %v2248 = vpack.c.b16 %v2240, %v2239
    %2257 = vmatprep.subr.bf16.mxu0 0
    %2258 = vmatpush1.bf16.msra.mxu0 %v2241
    %2259 = vmatprep.subr.bf16.mxu0 0
    %2260 = vmatpush1.bf16.msra.mxu0 %v2242
    %2261 = vmatprep.subr.bf16.mxu0 0
    %2262 = vmatpush1.bf16.msra.mxu0 %v2243
    %2263 = vmatprep.subr.bf16.mxu0 0
    %2264 = vmatpush1.bf16.msra.mxu0 %v2244
    %2265 = vmatprep.subr.bf16.mxu0 0
    %2266 = vmatpush1.bf16.msra.mxu0 %v2245
    %2267 = vmatprep.subr.bf16.mxu0 0
    %2268 = vmatpush1.bf16.msra.mxu0 %v2246
    %2269 = vmatprep.subr.bf16.mxu0 0
    %2270 = vmatpush1.bf16.msra.mxu0 %v2247
    %2271 = vmatprep.subr.bf16.mxu0 0
    %2272 = vmatpush1.bf16.msra.mxu0 %v2248
    %2273 = vmatprep.subr.bf16.mxu0 0
    %2274 = vmatpush1.bf16.msra.mxu0 0
    %2275 = vmatprep.subr.bf16.mxu0 0
    %2276 = vmatpush1.bf16.msra.mxu0 0
    %2277 = vmatprep.subr.bf16.mxu0 0
    %2278 = vmatpush1.bf16.msra.mxu0 0
    %2279 = vmatprep.subr.bf16.mxu0 0
    %2280 = vmatpush1.bf16.msra.mxu0 0
    %2281 = vmatprep.subr.bf16.mxu0 0
    %2282 = vmatpush1.bf16.msra.mxu0 0
    %2283 = vmatprep.subr.bf16.mxu0 0
    %2284 = vmatpush1.bf16.msra.mxu0 0
    %2285 = vmatprep.subr.bf16.mxu0 0
    %2286 = vmatpush1.bf16.msra.mxu0 0
    %2287 = vmatprep.subr.bf16.mxu0 0
    %2288 = vmatpush1.bf16.msra.mxu0 0
    %2289 = vmatprep.mubr.bf16.mxu0 0
    %2290 = vmatmul.mubr.bf16.gmra.mrb[0].mxu0 %v1617
    %v2291 = vpop.f32.mrb[0].mxu0
    %v2292 = vadd.f32 %v2208, %v2291
    %v2293 = vpop.f32.mrb[0].mxu0
    %v2294 = vpop.f32.mrb[0].mxu0
    %v2295 = vpop.f32.mrb[0].mxu0
    %2296 = vdwg.mxu0
    %v2297 = vadd.f32 %v2183, %v2292
    %v2298 = vmax.f32 %v2297, 0.0
    %2299 = vst [vmem:[#allocation21] sm:$0xff] %v2298
    // Predicated region
    $region90: #{tpu_custom_call.1} parent=1 // pred_check
      _
    $region91: #{tpu_custom_call.1} parent=1 // pred_check_branch
      %2301 = sbr.rel (0) target = $region93
    $region92: #{tpu_custom_call.1} parent=1 // pred_region
      %s2303 = ssub.s32 128, 128
      %2304 = vsyncadd [#allocation5], %s2303
      %s2306 = sshll.u32 [#allocation21], 4
      %s2307 = int_to_ptr.vmem [resolvable:$true] %s2306
      %2309 = dma.vmem_to_hbm [thread:$0]  %s2307, 128, %s11, [#allocation5]
    $region93: #{tpu_custom_call.1} parent=1 // pred_fallthru
      _
    // Predicated region
    $region94: #{tpu_custom_call.1} parent=1 // pred_check
      _
    $region95: #{tpu_custom_call.1} parent=1 // pred_check_branch
      %2311 = sbr.rel (0) target = $region97
    $region96: #{tpu_custom_call.1} parent=1 // pred_region
      %2312 = dma.done [#allocation5], 128
    $region97: #{tpu_custom_call.1} parent=1 // pred_fallthru
      _
    %2313 = vsyncpa [#allocation4], 1
    %2314 = vsyncpa [#allocation7], 1
    %2315 = vsyncpa [#allocation10], 1
    %2316 = vsyncpa [#allocation13], 1
    %2317 = vsyncpa [#allocation16], 1
    %2318 = vsyncpa [#allocation19], 1
    %2319 = vsyncpa [#allocation5], 1

</llo_original>
